<compile_context>
chip_gen: v6e
topology: v6e:2x2x1
jax: 0.10.0
libtpu: 0.0.40
codegen_flags: <defaults>
</compile_context>

<pallas_src>
import jax
import jax.numpy as jnp
from jax.experimental import pallas as pl
from jax.experimental.pallas import tpu as pltpu

# Small, module-consistent synthetic sizes.
N_BATCH = 2
NODE_SIZES = (256, 128, 64, 64, 16)       # stands in for [in_features, z*512, z*128, z*128, z]
CHANNEL_SIZES = (1, 32, 64, 64, 128)      # channel_sizes from the module
N_CLASSES = 8                             # len(meta['c2i'])

N0, N1, N2, _, N3 = NODE_SIZES
C0, C1, C2, C3, C4 = CHANNEL_SIZES
assert C2 == C3, "the I + W2 residual fold requires matching channel counts"


# --------------------------------------------------------------------------- kernel
def _residual_clf_kernel(x_ref, a0_ref, a1_ref, a3_ref, bd1_ref, bd2p_ref,
                         whead_ref, colpack_ref, bhead_ref, out_ref):
    f32 = jnp.float32

    # downsample0 aggregation: bf16 x bf16 -> f32 accumulate, MXU-native (no A0 upcast).
    agg0 = jnp.dot(x_ref[...], a0_ref[...], preferred_element_type=f32)          # (N, N1)

    colpack = colpack_ref[...]                                                   # (N*C3, 3)
    scale0 = colpack[0:C1, 0:1]                                                  # (C1, 1) = W0
    b0 = colpack[0:C1, 1:2]                                                      # (C1, 1)
    bz = colpack[:, 2:3]                                                         # (N*C3, 1)

    # downsample0 channel path: 1 -> C1 per-channel scale + bias on the VPU
    # (outer-product broadcasts), replacing the degenerate K=2 MXU matmul.
    y0 = jnp.concatenate(
        [agg0[n:n + 1, :] * scale0 + b0 for n in range(N_BATCH)], axis=0)        # (N*C1, N1)

    # bf16 weights are exact by construction; tiny upcasts keep the activation side
    # f32 so the end-to-end result stays within the 1e-3 reference tolerance.
    a1 = a1_ref[...].astype(f32)                                                 # (N1, N2)
    a3 = a3_ref[...].astype(f32)                                                 # (N2, N3)
    bd1 = bd1_ref[...].astype(f32)                                               # (N*C2, N*C1)

    # downsample1: aggregation then C1 -> C2 block-diag mix (its bias folded into bz).
    agg1 = jnp.dot(y0, a1, preferred_element_type=f32)                           # (N*C1, N2)
    y1 = jnp.dot(bd1, agg1, preferred_element_type=f32)                          # (N*C2, N2)

    # downsample2 (identity self-adjacency) + residual add, folded into one mixer:
    #   z = (y1 + b1) + W2 (y1 + b1) + b2 = (I + W2) y1 + ((I + W2) b1 + b2) = BD2' y1 + bz
    z = jnp.dot(bd2p_ref[...], y1, preferred_element_type=f32) + bz              # (N*C3, N2)

    # downsample3: aggregation only; its channel mix + the fc head live in whead/bhead.
    agg3 = jnp.dot(z, a3, preferred_element_type=f32)                            # (N*C3, N3)

    # Folded head: logits[k, n] = sum_{c,m} whead[k,c,m] * agg3[n*C3 + c, m] + bhead[k].
    whead = whead_ref[...]                                                       # (K, C3, N3)
    bhead = bhead_ref[...]                                                       # (K, 1)
    for n in range(N_BATCH):                                                     # static, tiny
        slab = agg3[n * C3:(n + 1) * C3, :]                                      # (C3, N3)
        prod = whead * slab[None, :, :]                                          # (K, C3, N3)
        s = jnp.sum(prod, axis=2)                                                # (K, C3)
        out_ref[:, n:n + 1] = jnp.sum(s, axis=1, keepdims=True) + bhead          # (K, 1)


def _full_spec(shape):
    nd = len(shape)
    return pl.BlockSpec(shape, lambda i, _nd=nd: (0,) * _nd)


def residual_classifier(x_bf16, operands):
    """x_bf16: (N, N0) bf16. operands: folded weights (see _fold_operands).
    Returns (N, K) f32 logits."""
    n = x_bf16.shape[0]
    all_in = (x_bf16,) + tuple(operands)

    # MAC count of the 5 MXU matmuls + VPU scale + folded head reduce (advisory).
    mm_macs = (n * N0 * N1                       # x @ A0
               + (n * C1) * N1 * N2              # y0 @ A1
               + (n * C2) * (n * C1) * N2        # BD1 @ agg1
               + (n * C3) * (n * C2) * N2        # BD2' @ y1
               + (n * C3) * N2 * N3              # z @ A3
               + n * C1 * N1                     # downsample0 VPU scale+bias
               + n * N_CLASSES * C3 * N3)        # folded head reduce
    bytes_accessed = (sum(int(o.size) * o.dtype.itemsize for o in all_in)
                      + n * N_CLASSES * 4)

    out = pl.pallas_call(
        _residual_clf_kernel,
        grid=(1,),
        in_specs=[_full_spec(o.shape) for o in all_in],
        out_specs=_full_spec((N_CLASSES, n)),
        out_shape=jax.ShapeDtypeStruct((N_CLASSES, n), jnp.float32),
        compiler_params=pltpu.CompilerParams(dimension_semantics=("arbitrary",)),
        cost_estimate=pl.CostEstimate(flops=2 * mm_macs, transcendentals=0,
                                      bytes_accessed=bytes_accessed),
    )(*all_in)
    # Wrapper-side layout plumbing on 16 elements: kernel emits (K, N); return (N, K).
    return out.T


# --------------------------------------------------------------------------- params
def _bf16_exact(a):
    # Round to bf16-representable values (so bf16 shipping of these tensors is exact).
    return a.astype(jnp.bfloat16).astype(jnp.float32)


def _weight_norm(v, g):
    # PyTorch weight_norm(dim=0): per output row, L2 norm over remaining dims (guarded).
    norm = jnp.sqrt(jnp.sum(v * v, axis=tuple(range(1, v.ndim)), keepdims=True))
    return g * v / jnp.maximum(norm, 1e-12)


def _block_adjacency(n_in, n_out):
    # Deterministic 0/1 block adjacency: output node j aggregates inputs [j*g, (j+1)*g).
    g = n_in // n_out
    return jax.nn.one_hot(jnp.arange(n_in) // g, n_out, dtype=jnp.float32)


def _make_raw_params(key):
    ks = jax.random.split(key, 15)

    def wn_weight(kv, kg, c_out, c_in):
        v = jax.random.normal(kv, (c_out, c_in), jnp.float32)
        g = (jnp.abs(jax.random.normal(kg, (c_out, 1), jnp.float32)) + 0.5) / jnp.sqrt(c_in)
        return _weight_norm(v, g)

    p = {}
    p["W0"] = wn_weight(ks[0], ks[1], C1, C0)                     # (C1, 1)
    p["b0"] = jax.random.normal(ks[2], (C1, 1), jnp.float32) * 0.1
    # W1 is quantised to bf16-representable values so BD1 = kron(I, W1) ships bf16 EXACTLY.
    p["W1"] = _bf16_exact(wn_weight(ks[3], ks[4], C2, C1))        # (C2, C1)
    p["b1"] = jax.random.normal(ks[5], (C2, 1), jnp.float32) * 0.1
    p["W2"] = wn_weight(ks[6], ks[7], C3, C2)                     # (C3, C2)
    p["b2"] = jax.random.normal(ks[8], (C3, 1), jnp.float32) * 0.1
    p["W3"] = wn_weight(ks[9], ks[10], C4, C3)                    # (C4, C3)
    p["b3"] = jax.random.normal(ks[11], (C4, 1), jnp.float32) * 0.1

    vf = jax.random.normal(ks[12], (N_CLASSES, C4 * N3), jnp.float32)
    gf = (jnp.abs(jax.random.normal(ks[13], (N_CLASSES, 1), jnp.float32)) + 0.5) / jnp.sqrt(C4 * N3)
    p["Wfc"] = _weight_norm(vf, gf)                               # (K, C4*N3)
    p["bfc"] = jax.random.normal(ks[14], (N_CLASSES,), jnp.float32) * 0.1

    p["A0"] = _block_adjacency(N0, N1)                            # (N0, N1)
    p["A1"] = _block_adjacency(N1, N2)                            # (N1, N2)
    p["A3"] = _block_adjacency(N2, N3)                            # (N2, N3)
    return p


def _fold_operands(p):
    """Host-side, one-time, exact algebraic folding of the module weights.

    Emits 8 operands (plus x): bf16 where exactly representable (0/1 adjacencies,
    BD1 from the bf16-quantised W1), f32 where a folded product would lose precision.
    """
    eye_n = jnp.eye(N_BATCH, dtype=jnp.float32)

    # downsample2 + residual:  BD2' = kron(I_N, I + W2),  bz = tile((I + W2) b1 + b2).
    w2p = jnp.eye(C2, dtype=jnp.float32) + p["W2"]                # (C3, C2)
    bd2p = jnp.kron(eye_n, w2p)                                   # (N*C3, N*C2) f32
    bz = jnp.tile(w2p @ p["b1"] + p["b2"], (N_BATCH, 1))          # (N*C3, 1)

    # downsample3 + fc head:  whead[k,c,m] = sum_c' Wfc[k,c',m] W3[c',c],
    #                          bhead[k]    = bfc[k] + sum_{c,m} Wfc[k,c,m] b3[c].
    wfc3 = p["Wfc"].reshape(N_CLASSES, C4, N3)                    # (K, C4, N3)
    whead = jnp.einsum('kcm,cd->kdm', wfc3, p["W3"])              # (K, C3, N3) f32
    bhead = (p["bfc"] + jnp.einsum('kcm,c->k', wfc3, p["b3"][:, 0])
             ).reshape(N_CLASSES, 1)                              # (K, 1)

    # Pack the remaining (rows, 1) columns into ONE operand: [W0 | b0 | bz].
    pad = jnp.zeros((N_BATCH * C3 - C1, 1), jnp.float32)
    colpack = jnp.concatenate(
        [jnp.concatenate([p["W0"], pad], axis=0),
         jnp.concatenate([p["b0"], pad], axis=0),
         bz], axis=1)                                             # (N*C3, 3)

    return (
        p["A0"].astype(jnp.bfloat16),                 # (N0, N1)  exact 0/1
        p["A1"].astype(jnp.bfloat16),                 # (N1, N2)  exact 0/1
        p["A3"].astype(jnp.bfloat16),                 # (N2, N3)  exact 0/1
        jnp.kron(eye_n, p["W1"]).astype(jnp.bfloat16),  # BD1 (N*C2, N*C1), exact in bf16
        bd2p,                                         # (N*C3, N*C2) f32
        whead,                                        # (K, C3, N3)  f32
        colpack,                                      # (N*C3, 3)    f32
        bhead,                                        # (K, 1)       f32
    )


# --------------------------------------------------------------------------- reference
def _reference(x, p):
    n = x.shape[0]
    agg0 = x @ p["A0"]                                                    # (N, N1)
    y0 = agg0[:, None, :] * p["W0"].reshape(1, C1, 1) + p["b0"].reshape(1, C1, 1)
    agg1 = jnp.einsum('ncj,jk->nck', y0, p["A1"])
    y1 = jnp.einsum('oc,nck->nok', p["W1"], agg1) + p["b1"].reshape(1, C2, 1)
    res = jnp.einsum('oc,nck->nok', p["W2"], y1) + p["b2"].reshape(1, C3, 1)   # self adj = I
    z = y1 + res
    agg3 = jnp.einsum('ncj,jm->ncm', z, p["A3"])
    y3 = jnp.einsum('oc,ncm->nom', p["W3"], agg3) + p["b3"].reshape(1, C4, 1)
    flat = y3.reshape(n, C4 * N3)                                          # .view(N, -1)
    return flat @ p["Wfc"].T + p["bfc"].reshape(1, N_CLASSES)


# --------------------------------------------------------------------------- main
if __name__ == "__main__":
    key = jax.random.PRNGKey(0)
    kx, kp = jax.random.split(key)

    # (N, in_features), channel dim 1 implicit.  x is rounded to bf16-representable so
    # the bf16 x bf16 MXU aggregation in the kernel is exact vs the f32 reference.
    x = _bf16_exact(jax.random.normal(kx, (N_BATCH, N0), dtype=jnp.float32))
    raw = _make_raw_params(kp)
    operands = _fold_operands(raw)

    logits = residual_classifier(x.astype(jnp.bfloat16), operands)
    logits = jax.block_until_ready(logits)

    ref = _reference(x, raw)
    assert logits.shape == (N_BATCH, N_CLASSES)
    assert jnp.allclose(logits, ref, atol=1e-3, rtol=1e-3), (logits, ref)

    print("KERNEL_OK")
</pallas_src>

<mosaic_0001>
module attributes {stable_mosaic.version = 11 : i64} {
  func.func @_residual_clf_kernel(%arg0: i32, %arg1: memref<2x256xbf16, #tpu.memory_space<vmem>>, %arg2: memref<256x128xbf16, #tpu.memory_space<vmem>>, %arg3: memref<128x64xbf16, #tpu.memory_space<vmem>>, %arg4: memref<64x16xbf16, #tpu.memory_space<vmem>>, %arg5: memref<128x64xbf16, #tpu.memory_space<vmem>>, %arg6: memref<128x128xf32, #tpu.memory_space<vmem>>, %arg7: memref<8x64x16xf32, #tpu.memory_space<vmem>>, %arg8: memref<128x3xf32, #tpu.memory_space<vmem>>, %arg9: memref<8x1xf32, #tpu.memory_space<vmem>>, %arg10: memref<8x2xf32, #tpu.memory_space<vmem>>) attributes {dimension_semantics = [#tpu.dimension_semantics<arbitrary>], iteration_bounds = array<i64: 1>, scalar_prefetch = 0 : i64, scratch_operands = 0 : i64, tpu.core_type = #tpu.core_type<tc>, window_params = [{pipeline_mode = #tpu.pipeline_mode<synchronous>, transform_indices = @transform_0, window_bounds = array<i64: 2, 256>}, {pipeline_mode = #tpu.pipeline_mode<synchronous>, transform_indices = @transform_1, window_bounds = array<i64: 256, 128>}, {pipeline_mode = #tpu.pipeline_mode<synchronous>, transform_indices = @transform_2, window_bounds = array<i64: 128, 64>}, {pipeline_mode = #tpu.pipeline_mode<synchronous>, transform_indices = @transform_3, window_bounds = array<i64: 64, 16>}, {pipeline_mode = #tpu.pipeline_mode<synchronous>, transform_indices = @transform_4, window_bounds = array<i64: 128, 64>}, {pipeline_mode = #tpu.pipeline_mode<synchronous>, transform_indices = @transform_5, window_bounds = array<i64: 128, 128>}, {pipeline_mode = #tpu.pipeline_mode<synchronous>, transform_indices = @transform_6, window_bounds = array<i64: 8, 64, 16>}, {pipeline_mode = #tpu.pipeline_mode<synchronous>, transform_indices = @transform_7, window_bounds = array<i64: 128, 3>}, {pipeline_mode = #tpu.pipeline_mode<synchronous>, transform_indices = @transform_8, window_bounds = array<i64: 8, 1>}, {pipeline_mode = #tpu.pipeline_mode<synchronous>, transform_indices = @transform_9, window_bounds = array<i64: 8, 2>}]} {
    %c0 = arith.constant 0 : index
    %c0_0 = arith.constant 0 : index
    %0 = vector.load %arg1[%c0, %c0_0] : memref<2x256xbf16, #tpu.memory_space<vmem>>, vector<2x256xbf16>
    %c0_1 = arith.constant 0 : index
    %c0_2 = arith.constant 0 : index
    %1 = vector.load %arg2[%c0_1, %c0_2] : memref<256x128xbf16, #tpu.memory_space<vmem>>, vector<256x128xbf16>
    %cst = arith.constant dense<0.000000e+00> : vector<2x128xf32>
    %2 = tpu.matmul %0, %1, %cst {dimension_numbers = #tpu.dot_dimension_numbers<[1], [0], [0], [1], [0, 0, 1, 1], [], []>} : vector<2x256xbf16>, vector<256x128xbf16>, vector<2x128xf32> -> vector<2x128xf32>
    %c0_3 = arith.constant 0 : index
    %c0_4 = arith.constant 0 : index
    %3 = vector.load %arg8[%c0_3, %c0_4] : memref<128x3xf32, #tpu.memory_space<vmem>>, vector<128x3xf32>
    %4 = vector.extract_strided_slice %3 {offsets = [0, 0], sizes = [32, 1], strides = [1, 1]} : vector<128x3xf32> to vector<32x1xf32>
    %5 = vector.extract_strided_slice %3 {offsets = [0, 1], sizes = [32, 1], strides = [1, 1]} : vector<128x3xf32> to vector<32x1xf32>
    %6 = vector.extract_strided_slice %3 {offsets = [0, 2], sizes = [128, 1], strides = [1, 1]} : vector<128x3xf32> to vector<128x1xf32>
    %7 = vector.extract_strided_slice %2 {offsets = [0, 0], sizes = [1, 128], strides = [1, 1]} : vector<2x128xf32> to vector<1x128xf32>
    %8 = vector.broadcast %7 : vector<1x128xf32> to vector<32x128xf32>
    %9 = vector.broadcast %4 : vector<32x1xf32> to vector<32x128xf32>
    %10 = arith.mulf %8, %9 : vector<32x128xf32>
    %11 = vector.broadcast %5 : vector<32x1xf32> to vector<32x128xf32>
    %12 = arith.addf %10, %11 : vector<32x128xf32>
    %13 = vector.extract_strided_slice %2 {offsets = [1, 0], sizes = [1, 128], strides = [1, 1]} : vector<2x128xf32> to vector<1x128xf32>
    %14 = vector.broadcast %13 : vector<1x128xf32> to vector<32x128xf32>
    %15 = vector.broadcast %4 : vector<32x1xf32> to vector<32x128xf32>
    %16 = arith.mulf %14, %15 : vector<32x128xf32>
    %17 = vector.broadcast %5 : vector<32x1xf32> to vector<32x128xf32>
    %18 = arith.addf %16, %17 : vector<32x128xf32>
    %19 = tpu.concatenate %12, %18 in 0 : vector<32x128xf32>, vector<32x128xf32> -> vector<64x128xf32>
    %c0_5 = arith.constant 0 : index
    %c0_6 = arith.constant 0 : index
    %20 = vector.load %arg3[%c0_5, %c0_6] : memref<128x64xbf16, #tpu.memory_space<vmem>>, vector<128x64xbf16>
    %21 = arith.extf %20 : vector<128x64xbf16> to vector<128x64xf32>
    %c0_7 = arith.constant 0 : index
    %c0_8 = arith.constant 0 : index
    %22 = vector.load %arg4[%c0_7, %c0_8] : memref<64x16xbf16, #tpu.memory_space<vmem>>, vector<64x16xbf16>
    %23 = arith.extf %22 : vector<64x16xbf16> to vector<64x16xf32>
    %c0_9 = arith.constant 0 : index
    %c0_10 = arith.constant 0 : index
    %24 = vector.load %arg5[%c0_9, %c0_10] : memref<128x64xbf16, #tpu.memory_space<vmem>>, vector<128x64xbf16>
    %25 = arith.extf %24 : vector<128x64xbf16> to vector<128x64xf32>
    %cst_11 = arith.constant dense<0.000000e+00> : vector<64x64xf32>
    %26 = tpu.matmul %19, %21, %cst_11 {dimension_numbers = #tpu.dot_dimension_numbers<[1], [0], [0], [1], [0, 0, 1, 1], [], []>} : vector<64x128xf32>, vector<128x64xf32>, vector<64x64xf32> -> vector<64x64xf32>
    %cst_12 = arith.constant dense<0.000000e+00> : vector<128x64xf32>
    %27 = tpu.matmul %25, %26, %cst_12 {dimension_numbers = #tpu.dot_dimension_numbers<[1], [0], [0], [1], [0, 0, 1, 1], [], []>} : vector<128x64xf32>, vector<64x64xf32>, vector<128x64xf32> -> vector<128x64xf32>
    %c0_13 = arith.constant 0 : index
    %c0_14 = arith.constant 0 : index
    %28 = vector.load %arg6[%c0_13, %c0_14] : memref<128x128xf32, #tpu.memory_space<vmem>>, vector<128x128xf32>
    %cst_15 = arith.constant dense<0.000000e+00> : vector<128x64xf32>
    %29 = tpu.matmul %28, %27, %cst_15 {dimension_numbers = #tpu.dot_dimension_numbers<[1], [0], [0], [1], [0, 0, 1, 1], [], []>} : vector<128x128xf32>, vector<128x64xf32>, vector<128x64xf32> -> vector<128x64xf32>
    %30 = vector.broadcast %6 : vector<128x1xf32> to vector<128x64xf32>
    %31 = arith.addf %29, %30 : vector<128x64xf32>
    %cst_16 = arith.constant dense<0.000000e+00> : vector<128x16xf32>
    %32 = tpu.matmul %31, %23, %cst_16 {dimension_numbers = #tpu.dot_dimension_numbers<[1], [0], [0], [1], [0, 0, 1, 1], [], []>} : vector<128x64xf32>, vector<64x16xf32>, vector<128x16xf32> -> vector<128x16xf32>
    %c0_17 = arith.constant 0 : index
    %c0_18 = arith.constant 0 : index
    %c0_19 = arith.constant 0 : index
    %33 = vector.load %arg7[%c0_17, %c0_18, %c0_19] : memref<8x64x16xf32, #tpu.memory_space<vmem>>, vector<8x64x16xf32>
    %c0_20 = arith.constant 0 : index
    %c0_21 = arith.constant 0 : index
    %34 = vector.load %arg9[%c0_20, %c0_21] : memref<8x1xf32, #tpu.memory_space<vmem>>, vector<8x1xf32>
    %35 = vector.extract_strided_slice %32 {offsets = [0, 0], sizes = [64, 16], strides = [1, 1]} : vector<128x16xf32> to vector<64x16xf32>
    %36 = vector.shape_cast %35 : vector<64x16xf32> to vector<1x64x16xf32>
    %37 = vector.broadcast %36 : vector<1x64x16xf32> to vector<8x64x16xf32>
    %38 = arith.mulf %33, %37 : vector<8x64x16xf32>
    %cst_22 = arith.constant dense<0.000000e+00> : vector<8x64xf32>
    %39 = vector.multi_reduction <add>, %38, %cst_22 [2] : vector<8x64x16xf32> to vector<8x64xf32>
    %cst_23 = arith.constant dense<0.000000e+00> : vector<8xf32>
    %40 = vector.multi_reduction <add>, %39, %cst_23 [1] : vector<8x64xf32> to vector<8xf32>
    %41 = vector.shape_cast %40 : vector<8xf32> to vector<8x1xf32>
    %42 = arith.addf %41, %34 : vector<8x1xf32>
    %c0_24 = arith.constant 0 : index
    %c0_25 = arith.constant 0 : index
    %43 = vector.load %arg10[%c0_24, %c0_25] : memref<8x2xf32, #tpu.memory_space<vmem>>, vector<8x1xf32>
    tpu.vector_store %arg10[%c0_24, %c0_25], %42 {strides = array<i32>} : memref<8x2xf32, #tpu.memory_space<vmem>>, vector<8x1xf32>,
    %44 = vector.extract_strided_slice %32 {offsets = [64, 0], sizes = [64, 16], strides = [1, 1]} : vector<128x16xf32> to vector<64x16xf32>
    %45 = vector.shape_cast %44 : vector<64x16xf32> to vector<1x64x16xf32>
    %46 = vector.broadcast %45 : vector<1x64x16xf32> to vector<8x64x16xf32>
    %47 = arith.mulf %33, %46 : vector<8x64x16xf32>
    %cst_26 = arith.constant dense<0.000000e+00> : vector<8x64xf32>
    %48 = vector.multi_reduction <add>, %47, %cst_26 [2] : vector<8x64x16xf32> to vector<8x64xf32>
    %cst_27 = arith.constant dense<0.000000e+00> : vector<8xf32>
    %49 = vector.multi_reduction <add>, %48, %cst_27 [1] : vector<8x64xf32> to vector<8xf32>
    %50 = vector.shape_cast %49 : vector<8xf32> to vector<8x1xf32>
    %51 = arith.addf %50, %34 : vector<8x1xf32>
    %c0_28 = arith.constant 0 : index
    %c1 = arith.constant 1 : index
    %52 = vector.load %arg10[%c0_28, %c1] : memref<8x2xf32, #tpu.memory_space<vmem>>, vector<8x1xf32>
    tpu.vector_store %arg10[%c0_28, %c1], %51 {strides = array<i32>} : memref<8x2xf32, #tpu.memory_space<vmem>>, vector<8x1xf32>,
    return
  }
  func.func @transform_0(%arg0: i32) -> (i32, i32) {
    %c0_i32 = arith.constant 0 : i32
    %c0_i32_0 = arith.constant 0 : i32
    %c0_i32_1 = arith.constant 0 : i32
    return %c0_i32, %c0_i32_0 : i32, i32
  }
  func.func @transform_1(%arg0: i32) -> (i32, i32) {
    %c0_i32 = arith.constant 0 : i32
    %c0_i32_0 = arith.constant 0 : i32
    %c0_i32_1 = arith.constant 0 : i32
    return %c0_i32, %c0_i32_0 : i32, i32
  }
  func.func @transform_2(%arg0: i32) -> (i32, i32) {
    %c0_i32 = arith.constant 0 : i32
    %c0_i32_0 = arith.constant 0 : i32
    %c0_i32_1 = arith.constant 0 : i32
    return %c0_i32, %c0_i32_0 : i32, i32
  }
  func.func @transform_3(%arg0: i32) -> (i32, i32) {
    %c0_i32 = arith.constant 0 : i32
    %c0_i32_0 = arith.constant 0 : i32
    %c0_i32_1 = arith.constant 0 : i32
    return %c0_i32, %c0_i32_0 : i32, i32
  }
  func.func @transform_4(%arg0: i32) -> (i32, i32) {
    %c0_i32 = arith.constant 0 : i32
    %c0_i32_0 = arith.constant 0 : i32
    %c0_i32_1 = arith.constant 0 : i32
    return %c0_i32, %c0_i32_0 : i32, i32
  }
  func.func @transform_5(%arg0: i32) -> (i32, i32) {
    %c0_i32 = arith.constant 0 : i32
    %c0_i32_0 = arith.constant 0 : i32
    %c0_i32_1 = arith.constant 0 : i32
    return %c0_i32, %c0_i32_0 : i32, i32
  }
  func.func @transform_6(%arg0: i32) -> (i32, i32, i32) {
    %c0_i32 = arith.constant 0 : i32
    %c0_i32_0 = arith.constant 0 : i32
    %c0_i32_1 = arith.constant 0 : i32
    %c0_i32_2 = arith.constant 0 : i32
    return %c0_i32, %c0_i32_0, %c0_i32_1 : i32, i32, i32
  }
  func.func @transform_7(%arg0: i32) -> (i32, i32) {
    %c0_i32 = arith.constant 0 : i32
    %c0_i32_0 = arith.constant 0 : i32
    %c0_i32_1 = arith.constant 0 : i32
    return %c0_i32, %c0_i32_0 : i32, i32
  }
  func.func @transform_8(%arg0: i32) -> (i32, i32) {
    %c0_i32 = arith.constant 0 : i32
    %c0_i32_0 = arith.constant 0 : i32
    %c0_i32_1 = arith.constant 0 : i32
    return %c0_i32, %c0_i32_0 : i32, i32
  }
  func.func @transform_9(%arg0: i32) -> (i32, i32) {
    %c0_i32 = arith.constant 0 : i32
    %c0_i32_0 = arith.constant 0 : i32
    %c0_i32_1 = arith.constant 0 : i32
    return %c0_i32, %c0_i32_0 : i32, i32
  }
}

</mosaic_0001>

<llo_original>
// kernel: tpu_custom_call.1
$region0: #{tpu_custom_call.1}
  #allocation0 [shape = 'u32[]', space=smem, size = 0x4, offset = 0x4, fixed_abs, tag = 'smem constant byte address 0x4 - core index']
  #allocation1 [shape = 'u32[144,128]{1,0:T(1,128)}', space=vmem, size = 0x12000, scoped, tag = 'internal scratch']
  %s0 = inlined_call_operand.vmem [shape: bf16[2,256], index: 0, kind: input, shape index: {}]
  %s1 = inlined_call_operand.vmem [shape: bf16[256,128], index: 1, kind: input, shape index: {}]
  %s2 = inlined_call_operand.vmem [shape: bf16[128,64], index: 2, kind: input, shape index: {}]
  %s3 = inlined_call_operand.vmem [shape: bf16[64,16], index: 3, kind: input, shape index: {}]
  %s4 = inlined_call_operand.vmem [shape: bf16[128,64], index: 4, kind: input, shape index: {}]
  %s5 = inlined_call_operand.vmem [shape: f32[128,128], index: 5, kind: input, shape index: {}]
  %s6 = inlined_call_operand.vmem [shape: f32[8,64,16], index: 6, kind: input, shape index: {}]
  %s7 = inlined_call_operand.vmem [shape: f32[128,3], index: 7, kind: input, shape index: {}]
  %s8 = inlined_call_operand.vmem [shape: f32[8,1], index: 8, kind: input, shape index: {}]
  %s9 = inlined_call_operand.vmem [shape: f32[8,2], index: 9, kind: output, shape index: {}]
  %s10 = sld [smem:[#allocation0]]
  $region46: #{tpu_custom_call.1} parent=0
    _
  %s12 = ssub.s32 1, %s10
  %s13 = scalar_select 0, %s12, %s10
  // Predicated region
  $region2: #{tpu_custom_call.1} parent=0 // pred_check
    _
  $region3: #{tpu_custom_call.1} parent=0 // pred_check_branch
    %15 = sbr.rel (0) target = $region5
  $region4: #{tpu_custom_call.1} parent=0 // pred_region
    _
  $region5: #{tpu_custom_call.1} parent=0 // pred_fallthru
    _
  // Predicated region
  $region6: #{tpu_custom_call.1} parent=0 // pred_check
    _
  $region7: #{tpu_custom_call.1} parent=0 // pred_check_branch
    %17 = sbr.rel (0) target = $region9
  $region8: #{tpu_custom_call.1} parent=0 // pred_region
    _
  $region9: #{tpu_custom_call.1} parent=0 // pred_fallthru
    _
  // Predicated region
  $region10: #{tpu_custom_call.1} parent=0 // pred_check
    _
  $region11: #{tpu_custom_call.1} parent=0 // pred_check_branch
    %19 = sbr.rel (0) target = $region13
  $region12: #{tpu_custom_call.1} parent=0 // pred_region
    _
  $region13: #{tpu_custom_call.1} parent=0 // pred_fallthru
    _
  // Predicated region
  $region14: #{tpu_custom_call.1} parent=0 // pred_check
    _
  $region15: #{tpu_custom_call.1} parent=0 // pred_check_branch
    %21 = sbr.rel (0) target = $region17
  $region16: #{tpu_custom_call.1} parent=0 // pred_region
    _
  $region17: #{tpu_custom_call.1} parent=0 // pred_fallthru
    _
  // Predicated region
  $region18: #{tpu_custom_call.1} parent=0 // pred_check
    _
  $region19: #{tpu_custom_call.1} parent=0 // pred_check_branch
    %23 = sbr.rel (0) target = $region21
  $region20: #{tpu_custom_call.1} parent=0 // pred_region
    _
  $region21: #{tpu_custom_call.1} parent=0 // pred_fallthru
    _
  // Predicated region
  $region22: #{tpu_custom_call.1} parent=0 // pred_check
    _
  $region23: #{tpu_custom_call.1} parent=0 // pred_check_branch
    %25 = sbr.rel (0) target = $region25
  $region24: #{tpu_custom_call.1} parent=0 // pred_region
    _
  $region25: #{tpu_custom_call.1} parent=0 // pred_fallthru
    _
  // Predicated region
  $region26: #{tpu_custom_call.1} parent=0 // pred_check
    _
  $region27: #{tpu_custom_call.1} parent=0 // pred_check_branch
    %27 = sbr.rel (0) target = $region29
  $region28: #{tpu_custom_call.1} parent=0 // pred_region
    _
  $region29: #{tpu_custom_call.1} parent=0 // pred_fallthru
    _
  // Predicated region
  $region30: #{tpu_custom_call.1} parent=0 // pred_check
    _
  $region31: #{tpu_custom_call.1} parent=0 // pred_check_branch
    %29 = sbr.rel (0) target = $region33
  $region32: #{tpu_custom_call.1} parent=0 // pred_region
    _
  $region33: #{tpu_custom_call.1} parent=0 // pred_fallthru
    _
  // Predicated region
  $region34: #{tpu_custom_call.1} parent=0 // pred_check
    _
  $region35: #{tpu_custom_call.1} parent=0 // pred_check_branch
    %31 = sbr.rel (0) target = $region37
  $region36: #{tpu_custom_call.1} parent=0 // pred_region
    _
  $region37: #{tpu_custom_call.1} parent=0 // pred_fallthru
    _
  %v33 = vld [vmem:[%s0] sm:$0x3]
  %v34 = vld [vmem:[%s1] sm:$0xf]
  %v35 = vld [vmem:[%s1 + $0x4] sm:$0xf]
  %v36 = vld [vmem:[%s1 + $0x8] sm:$0xf]
  %v37 = vld [vmem:[%s1 + $0xc] sm:$0xf]
  %v38 = vld [vmem:[%s1 + $0x10] sm:$0xf]
  %v39 = vld [vmem:[%s1 + $0x14] sm:$0xf]
  %v40 = vld [vmem:[%s1 + $0x18] sm:$0xf]
  %v41 = vld [vmem:[%s1 + $0x1c] sm:$0xf]
  %v42 = vld [vmem:[%s1 + $0x20] sm:$0xf]
  %v43 = vld [vmem:[%s1 + $0x24] sm:$0xf]
  %v44 = vld [vmem:[%s1 + $0x28] sm:$0xf]
  %v45 = vld [vmem:[%s1 + $0x2c] sm:$0xf]
  %v46 = vld [vmem:[%s1 + $0x30] sm:$0xf]
  %v47 = vld [vmem:[%s1 + $0x34] sm:$0xf]
  %v48 = vld [vmem:[%s1 + $0x38] sm:$0xf]
  %v49 = vld [vmem:[%s1 + $0x3c] sm:$0xf]
  %v50 = vld [vmem:[%s1 + $0x40] sm:$0xf]
  %v51 = vld [vmem:[%s1 + $0x44] sm:$0xf]
  %v52 = vld [vmem:[%s1 + $0x48] sm:$0xf]
  %v53 = vld [vmem:[%s1 + $0x4c] sm:$0xf]
  %v54 = vld [vmem:[%s1 + $0x50] sm:$0xf]
  %v55 = vld [vmem:[%s1 + $0x54] sm:$0xf]
  %v56 = vld [vmem:[%s1 + $0x58] sm:$0xf]
  %v57 = vld [vmem:[%s1 + $0x5c] sm:$0xf]
  %v58 = vld [vmem:[%s1 + $0x60] sm:$0xf]
  %v59 = vld [vmem:[%s1 + $0x64] sm:$0xf]
  %v60 = vld [vmem:[%s1 + $0x68] sm:$0xf]
  %v61 = vld [vmem:[%s1 + $0x6c] sm:$0xf]
  %v62 = vld [vmem:[%s1 + $0x70] sm:$0xf]
  %v63 = vld [vmem:[%s1 + $0x74] sm:$0xf]
  %v64 = vld [vmem:[%s1 + $0x78] sm:$0xf]
  %v65 = vld [vmem:[%s1 + $0x7c] sm:$0xf]
  %v68 = vunpack.c.l.s4 1966171168
  %v69 = vunpack.c.0.s8 %v68
  %v70 = vlaneseq
  %v71 = vshrl.u32 %v70, 7
  %v72 = vsub.s32 %v69, %v71
  %v73 = vrot.slane %v33, %v72
  %v74 = vcombine.high %v73, %v73
  %v76 = vunpack.c.l.s4 1966171168
  %v77 = vunpack.c.0.s8 %v76
  %v78 = vlaneseq
  %v79 = vshrl.u32 %v78, 7
  %v80 = vsub.s32 %v77, %v79
  %v81 = vrot.slane %v73, %v80
  %v83 = vunpack.c.l.s4 1966171168
  %v84 = vunpack.c.0.s8 %v83
  %v85 = vlaneseq
  %v86 = vshrl.u32 %v85, 7
  %v87 = vsub.s32 %v84, %v86
  %v88 = vrot.slane %v74, %v87
  %v123 = vunpack.c.l.b16 %v34
  %v124 = vunpack.c.l.b16 %v35
  %v125 = vunpack.c.l.b16 %v36
  %v126 = vunpack.c.l.b16 %v37
  %v127 = vunpack.c.l.b16 %v38
  %v128 = vunpack.c.l.b16 %v39
  %v129 = vunpack.c.l.b16 %v40
  %v130 = vunpack.c.l.b16 %v41
  %v131 = vunpack.c.l.b16 %v42
  %v132 = vunpack.c.l.b16 %v43
  %v133 = vunpack.c.l.b16 %v44
  %v134 = vunpack.c.l.b16 %v45
  %v135 = vunpack.c.l.b16 %v46
  %v136 = vunpack.c.l.b16 %v47
  %v137 = vunpack.c.l.b16 %v48
  %v138 = vunpack.c.l.b16 %v49
  %v139 = vunpack.c.l.b16 %v50
  %v140 = vunpack.c.l.b16 %v51
  %v141 = vunpack.c.l.b16 %v52
  %v142 = vunpack.c.l.b16 %v53
  %v143 = vunpack.c.l.b16 %v54
  %v144 = vunpack.c.l.b16 %v55
  %v145 = vunpack.c.l.b16 %v56
  %v146 = vunpack.c.l.b16 %v57
  %v147 = vunpack.c.l.b16 %v58
  %v148 = vunpack.c.l.b16 %v59
  %v149 = vunpack.c.l.b16 %v60
  %v150 = vunpack.c.l.b16 %v61
  %v151 = vunpack.c.l.b16 %v62
  %v152 = vunpack.c.l.b16 %v63
  %v153 = vunpack.c.l.b16 %v64
  %v154 = vunpack.c.l.b16 %v65
  %v155 = vpack.c.b16 %v124, %v123
  %v156 = vpack.c.b16 %v126, %v125
  %v157 = vpack.c.b16 %v128, %v127
  %v158 = vpack.c.b16 %v130, %v129
  %v159 = vpack.c.b16 %v132, %v131
  %v160 = vpack.c.b16 %v134, %v133
  %v161 = vpack.c.b16 %v136, %v135
  %v162 = vpack.c.b16 %v138, %v137
  %v163 = vpack.c.b16 %v140, %v139
  %v164 = vpack.c.b16 %v142, %v141
  %v165 = vpack.c.b16 %v144, %v143
  %v166 = vpack.c.b16 %v146, %v145
  %v167 = vpack.c.b16 %v148, %v147
  %v168 = vpack.c.b16 %v150, %v149
  %v169 = vpack.c.b16 %v152, %v151
  %v170 = vpack.c.b16 %v154, %v153
  %187 = vmatprep.subr.bf16.mxu0 0
  %188 = vmatpush1.bf16.msra.mxu0 %v162
  %189 = vmatprep.subr.bf16.mxu0 0
  %190 = vmatpush1.bf16.msra.mxu0 %v161
  %191 = vmatprep.subr.bf16.mxu0 0
  %192 = vmatpush1.bf16.msra.mxu0 %v160
  %193 = vmatprep.subr.bf16.mxu0 0
  %194 = vmatpush1.bf16.msra.mxu0 %v159
  %195 = vmatprep.subr.bf16.mxu0 0
  %196 = vmatpush1.bf16.msra.mxu0 %v158
  %197 = vmatprep.subr.bf16.mxu0 0
  %198 = vmatpush1.bf16.msra.mxu0 %v157
  %199 = vmatprep.subr.bf16.mxu0 0
  %200 = vmatpush1.bf16.msra.mxu0 %v156
  %201 = vmatprep.subr.bf16.mxu0 0
  %202 = vmatpush1.bf16.msra.mxu0 %v155
  %203 = vmatprep.subr.bf16.mxu0 0
  %204 = vmatpush2.bf16.msra.mxu0 %v170
  %205 = vmatprep.subr.bf16.mxu0 0
  %206 = vmatpush2.bf16.msra.mxu0 %v169
  %207 = vmatprep.subr.bf16.mxu0 0
  %208 = vmatpush2.bf16.msra.mxu0 %v168
  %209 = vmatprep.subr.bf16.mxu0 0
  %210 = vmatpush2.bf16.msra.mxu0 %v167
  %211 = vmatprep.subr.bf16.mxu0 0
  %212 = vmatpush2.bf16.msra.mxu0 %v166
  %213 = vmatprep.subr.bf16.mxu0 0
  %214 = vmatpush2.bf16.msra.mxu0 %v165
  %215 = vmatprep.subr.bf16.mxu0 0
  %216 = vmatpush2.bf16.msra.mxu0 %v164
  %217 = vmatprep.subr.bf16.mxu0 0
  %218 = vmatpush2.bf16.msra.mxu0 %v163
  %219 = vmatprep.mubr.bf16.mxu0 %v88
  %220 = vmatmul.mubr.bf16.gmra.mxu0 %v81
  %v221 = vpop.f32.mrf.mxu0
  %v222 = vadd.f32 0.0, %v221
  %v223 = vpop.f32.mrf.mxu0
  %v224 = vpop.f32.mrf.mxu0
  %v225 = vpop.f32.mrf.mxu0
  %226 = vdwg.mxu0
  %v227 = vld [vmem:[%s7] sm:$0xff]
  %v228 = vld [vmem:[%s7 + $0x8] sm:$0xff]
  %v229 = vld [vmem:[%s7 + $0x10] sm:$0xff]
  %v230 = vld [vmem:[%s7 + $0x18] sm:$0xff]
  %v231 = vld [vmem:[%s7 + $0x20] sm:$0xff]
  %v232 = vld [vmem:[%s7 + $0x28] sm:$0xff]
  %v233 = vld [vmem:[%s7 + $0x30] sm:$0xff]
  %v234 = vld [vmem:[%s7 + $0x38] sm:$0xff]
  %v235 = vld [vmem:[%s7 + $0x40] sm:$0xff]
  %v236 = vld [vmem:[%s7 + $0x48] sm:$0xff]
  %v237 = vld [vmem:[%s7 + $0x50] sm:$0xff]
  %v238 = vld [vmem:[%s7 + $0x58] sm:$0xff]
  %v239 = vld [vmem:[%s7 + $0x60] sm:$0xff]
  %v240 = vld [vmem:[%s7 + $0x68] sm:$0xff]
  %v241 = vld [vmem:[%s7 + $0x70] sm:$0xff]
  %v242 = vld [vmem:[%s7 + $0x78] sm:$0xff]
  %v243 = vlaneseq
  %v244 = vshrl.u32 %v243, 7
  %v245 = vsub.s32 0, %v244
  %v246 = vrot.slane %v222, %v245
  %248 = vset.pattern.permute.xlu0 0
  %249 = vperm.xlu0 %248, %v227
  %v250 = vpop.permute.xlu0 %249
  %253 = vset.pattern.permute.xlu0 0
  %254 = vperm.xlu0 %253, %v228
  %v255 = vpop.permute.xlu0 %254
  %258 = vset.pattern.permute.xlu0 0
  %259 = vperm.xlu0 %258, %v229
  %v260 = vpop.permute.xlu0 %259
  %263 = vset.pattern.permute.xlu0 0
  %264 = vperm.xlu0 %263, %v230
  %v265 = vpop.permute.xlu0 %264
  %v267 = vmul.f32 %v246, %v250
  %v268 = vmul.f32 %v246, %v255
  %v269 = vmul.f32 %v246, %v260
  %v270 = vmul.f32 %v246, %v265
  %271 = vset.pattern.permute.xlu0 1
  %272 = vperm.xlu0 %271, %v227
  %v273 = vpop.permute.xlu0 %272
  %275 = vset.pattern.permute.xlu0 1
  %276 = vperm.xlu0 %275, %v228
  %v277 = vpop.permute.xlu0 %276
  %279 = vset.pattern.permute.xlu0 1
  %280 = vperm.xlu0 %279, %v229
  %v281 = vpop.permute.xlu0 %280
  %283 = vset.pattern.permute.xlu0 1
  %284 = vperm.xlu0 %283, %v230
  %v285 = vpop.permute.xlu0 %284
  %v287 = vadd.f32 %v267, %v273
  %v288 = vadd.f32 %v268, %v277
  %v289 = vadd.f32 %v269, %v281
  %v290 = vadd.f32 %v270, %v285
  %v291 = vlaneseq
  %v292 = vshrl.u32 %v291, 7
  %v293 = vsub.s32 1, %v292
  %v294 = vrot.slane %v222, %v293
  %v295 = vmul.f32 %v294, %v250
  %v296 = vmul.f32 %v294, %v255
  %v297 = vmul.f32 %v294, %v260
  %v298 = vmul.f32 %v294, %v265
  %v299 = vadd.f32 %v295, %v273
  %v300 = vadd.f32 %v296, %v277
  %v301 = vadd.f32 %v297, %v281
  %v302 = vadd.f32 %v298, %v285
  %v303 = vld [vmem:[%s2] sm:$0xf]
  %v304 = vld [vmem:[%s2 + $0x4] sm:$0xf]
  %v305 = vld [vmem:[%s2 + $0x8] sm:$0xf]
  %v306 = vld [vmem:[%s2 + $0xc] sm:$0xf]
  %v307 = vld [vmem:[%s2 + $0x10] sm:$0xf]
  %v308 = vld [vmem:[%s2 + $0x14] sm:$0xf]
  %v309 = vld [vmem:[%s2 + $0x18] sm:$0xf]
  %v310 = vld [vmem:[%s2 + $0x1c] sm:$0xf]
  %v311 = vld [vmem:[%s2 + $0x20] sm:$0xf]
  %v312 = vld [vmem:[%s2 + $0x24] sm:$0xf]
  %v313 = vld [vmem:[%s2 + $0x28] sm:$0xf]
  %v314 = vld [vmem:[%s2 + $0x2c] sm:$0xf]
  %v315 = vld [vmem:[%s2 + $0x30] sm:$0xf]
  %v316 = vld [vmem:[%s2 + $0x34] sm:$0xf]
  %v317 = vld [vmem:[%s2 + $0x38] sm:$0xf]
  %v318 = vld [vmem:[%s2 + $0x3c] sm:$0xf]
  %v319 = vunpack.c.l.bf16 %v303
  %v320 = vunpack.c.l.bf16 %v304
  %v321 = vunpack.c.l.bf16 %v305
  %v322 = vunpack.c.l.bf16 %v306
  %v323 = vunpack.c.l.bf16 %v307
  %v324 = vunpack.c.l.bf16 %v308
  %v325 = vunpack.c.l.bf16 %v309
  %v326 = vunpack.c.l.bf16 %v310
  %v327 = vunpack.c.l.bf16 %v311
  %v328 = vunpack.c.l.bf16 %v312
  %v329 = vunpack.c.l.bf16 %v313
  %v330 = vunpack.c.l.bf16 %v314
  %v331 = vunpack.c.l.bf16 %v315
  %v332 = vunpack.c.l.bf16 %v316
  %v333 = vunpack.c.l.bf16 %v317
  %v334 = vunpack.c.l.bf16 %v318
  %v335 = vld [vmem:[%s3] sm:$0xf]
  %v336 = vld [vmem:[%s3 + $0x4] sm:$0xf]
  %v337 = vld [vmem:[%s3 + $0x8] sm:$0xf]
  %v338 = vld [vmem:[%s3 + $0xc] sm:$0xf]
  %v339 = vld [vmem:[%s3 + $0x10] sm:$0xf]
  %v340 = vld [vmem:[%s3 + $0x14] sm:$0xf]
  %v341 = vld [vmem:[%s3 + $0x18] sm:$0xf]
  %v342 = vld [vmem:[%s3 + $0x1c] sm:$0xf]
  %v343 = vunpack.c.l.bf16 %v335
  %v344 = vunpack.c.l.bf16 %v336
  %v345 = vunpack.c.l.bf16 %v337
  %v346 = vunpack.c.l.bf16 %v338
  %v347 = vunpack.c.l.bf16 %v339
  %v348 = vunpack.c.l.bf16 %v340
  %v349 = vunpack.c.l.bf16 %v341
  %v350 = vunpack.c.l.bf16 %v342
  %v351 = vld [vmem:[%s4] sm:$0xf]
  %v352 = vld [vmem:[%s4 + $0x4] sm:$0xf]
  %v353 = vld [vmem:[%s4 + $0x8] sm:$0xf]
  %v354 = vld [vmem:[%s4 + $0xc] sm:$0xf]
  %v355 = vld [vmem:[%s4 + $0x10] sm:$0xf]
  %v356 = vld [vmem:[%s4 + $0x14] sm:$0xf]
  %v357 = vld [vmem:[%s4 + $0x18] sm:$0xf]
  %v358 = vld [vmem:[%s4 + $0x1c] sm:$0xf]
  %v359 = vld [vmem:[%s4 + $0x20] sm:$0xf]
  %v360 = vld [vmem:[%s4 + $0x24] sm:$0xf]
  %v361 = vld [vmem:[%s4 + $0x28] sm:$0xf]
  %v362 = vld [vmem:[%s4 + $0x2c] sm:$0xf]
  %v363 = vld [vmem:[%s4 + $0x30] sm:$0xf]
  %v364 = vld [vmem:[%s4 + $0x34] sm:$0xf]
  %v365 = vld [vmem:[%s4 + $0x38] sm:$0xf]
  %v366 = vld [vmem:[%s4 + $0x3c] sm:$0xf]
  %v367 = vunpack.c.l.bf16 %v351
  %v368 = vunpack.c.l.bf16 %v352
  %v369 = vunpack.c.l.bf16 %v353
  %v370 = vunpack.c.l.bf16 %v354
  %v371 = vunpack.c.l.bf16 %v355
  %v372 = vunpack.c.l.bf16 %v356
  %v373 = vunpack.c.l.bf16 %v357
  %v374 = vunpack.c.l.bf16 %v358
  %v375 = vunpack.c.l.bf16 %v359
  %v376 = vunpack.c.l.bf16 %v360
  %v377 = vunpack.c.l.bf16 %v361
  %v378 = vunpack.c.l.bf16 %v362
  %v379 = vunpack.c.l.bf16 %v363
  %v380 = vunpack.c.l.bf16 %v364
  %v381 = vunpack.c.l.bf16 %v365
  %v382 = vunpack.c.l.bf16 %v366
  %383 = vmatprep.subr.mxu0 0.0
  %384 = vmatpush1.msra.mxu0 %v334
  %385 = vmatprep.subr.mxu0 0.0
  %386 = vmatpush1.msra.mxu0 %v333
  %387 = vmatprep.subr.mxu0 0.0
  %388 = vmatpush1.msra.mxu0 %v332
  %389 = vmatprep.subr.mxu0 0.0
  %390 = vmatpush1.msra.mxu0 %v331
  %391 = vmatprep.subr.mxu0 0.0
  %392 = vmatpush1.msra.mxu0 %v330
  %393 = vmatprep.subr.mxu0 0.0
  %394 = vmatpush1.msra.mxu0 %v329
  %395 = vmatprep.subr.mxu0 0.0
  %396 = vmatpush1.msra.mxu0 %v328
  %397 = vmatprep.subr.mxu0 0.0
  %398 = vmatpush1.msra.mxu0 %v327
  %399 = vmatprep.subr.mxu0 0.0
  %400 = vmatpush1.msra.mxu0 %v326
  %401 = vmatprep.subr.mxu0 0.0
  %402 = vmatpush1.msra.mxu0 %v325
  %403 = vmatprep.subr.mxu0 0.0
  %404 = vmatpush1.msra.mxu0 %v324
  %405 = vmatprep.subr.mxu0 0.0
  %406 = vmatpush1.msra.mxu0 %v323
  %407 = vmatprep.subr.mxu0 0.0
  %408 = vmatpush1.msra.mxu0 %v322
  %409 = vmatprep.subr.mxu0 0.0
  %410 = vmatpush1.msra.mxu0 %v321
  %411 = vmatprep.subr.mxu0 0.0
  %412 = vmatpush1.msra.mxu0 %v320
  %413 = vmatprep.subr.mxu0 0.0
  %414 = vmatpush1.msra.mxu0 %v319
  %415 = vmatprep.subr.mxu0 0.0
  %416 = vmatpush2.msra.mxu0 0.0
  %417 = vmatprep.subr.mxu0 0.0
  %418 = vmatpush2.msra.mxu0 0.0
  %419 = vmatprep.subr.mxu0 0.0
  %420 = vmatpush2.msra.mxu0 0.0
  %421 = vmatprep.subr.mxu0 0.0
  %422 = vmatpush2.msra.mxu0 0.0
  %423 = vmatprep.subr.mxu0 0.0
  %424 = vmatpush2.msra.mxu0 0.0
  %425 = vmatprep.subr.mxu0 0.0
  %426 = vmatpush2.msra.mxu0 0.0
  %427 = vmatprep.subr.mxu0 0.0
  %428 = vmatpush2.msra.mxu0 0.0
  %429 = vmatprep.subr.mxu0 0.0
  %430 = vmatpush2.msra.mxu0 0.0
  %431 = vmatprep.subr.mxu0 0.0
  %432 = vmatpush2.msra.mxu0 0.0
  %433 = vmatprep.subr.mxu0 0.0
  %434 = vmatpush2.msra.mxu0 0.0
  %435 = vmatprep.subr.mxu0 0.0
  %436 = vmatpush2.msra.mxu0 0.0
  %437 = vmatprep.subr.mxu0 0.0
  %438 = vmatpush2.msra.mxu0 0.0
  %439 = vmatprep.subr.mxu0 0.0
  %440 = vmatpush2.msra.mxu0 0.0
  %441 = vmatprep.subr.mxu0 0.0
  %442 = vmatpush2.msra.mxu0 0.0
  %443 = vmatprep.subr.mxu0 0.0
  %444 = vmatpush2.msra.mxu0 0.0
  %445 = vmatprep.subr.mxu0 0.0
  %446 = vmatpush2.msra.mxu0 0.0
  %447 = vmatprep.mubr.f32.mxu0 0.0
  %448 = vmatmul.mubr.f32.gmra.mxu0 %v287
  %v449 = vpop.f32.mrf.mxu0
  %v450 = vadd.f32 0.0, %v449
  %v451 = vpop.f32.mrf.mxu0
  %452 = vmatprep.mubr.f32.mxu0 0.0
  %453 = vmatmul.mubr.f32.gmra.mxu0 %v288
  %v454 = vpop.f32.mrf.mxu0
  %v455 = vadd.f32 0.0, %v454
  %v456 = vpop.f32.mrf.mxu0
  %457 = vmatprep.mubr.f32.mxu0 0.0
  %458 = vmatmul.mubr.f32.gmra.mxu0 %v289
  %v459 = vpop.f32.mrf.mxu0
  %v460 = vadd.f32 0.0, %v459
  %v461 = vpop.f32.mrf.mxu0
  %462 = vmatprep.mubr.f32.mxu0 0.0
  %463 = vmatmul.mubr.f32.gmra.mxu0 %v290
  %v464 = vpop.f32.mrf.mxu0
  %v465 = vadd.f32 0.0, %v464
  %v466 = vpop.f32.mrf.mxu0
  %467 = vmatprep.mubr.f32.mxu0 0.0
  %468 = vmatmul.mubr.f32.gmra.mxu0 %v299
  %v469 = vpop.f32.mrf.mxu0
  %v470 = vadd.f32 0.0, %v469
  %v471 = vpop.f32.mrf.mxu0
  %472 = vmatprep.mubr.f32.mxu0 0.0
  %473 = vmatmul.mubr.f32.gmra.mxu0 %v300
  %v474 = vpop.f32.mrf.mxu0
  %v475 = vadd.f32 0.0, %v474
  %v476 = vpop.f32.mrf.mxu0
  %477 = vmatprep.mubr.f32.mxu0 0.0
  %478 = vmatmul.mubr.f32.gmra.mxu0 %v301
  %v479 = vpop.f32.mrf.mxu0
  %v480 = vadd.f32 0.0, %v479
  %v481 = vpop.f32.mrf.mxu0
  %482 = vmatprep.mubr.f32.mxu0 0.0
  %483 = vmatmul.mubr.f32.gmra.mxu0 %v302
  %v484 = vpop.f32.mrf.mxu0
  %v485 = vadd.f32 0.0, %v484
  %v486 = vpop.f32.mrf.mxu0
  %487 = vdwg.mxu0
  %vm488 = vcmask 523264
  %v490 = vsel %vm488, %v367, 0
  %v493 = vsel %vm488, %v368, 0
  %v496 = vsel %vm488, %v369, 0
  %v499 = vsel %vm488, %v370, 0
  %v502 = vsel %vm488, %v371, 0
  %v505 = vsel %vm488, %v372, 0
  %v508 = vsel %vm488, %v373, 0
  %v511 = vsel %vm488, %v374, 0
  %v514 = vsel %vm488, %v375, 0
  %v517 = vsel %vm488, %v376, 0
  %v520 = vsel %vm488, %v377, 0
  %v523 = vsel %vm488, %v378, 0
  %v526 = vsel %vm488, %v379, 0
  %v529 = vsel %vm488, %v380, 0
  %v532 = vsel %vm488, %v381, 0
  %v535 = vsel %vm488, %v382, 0
  %537 = vmatprep.subr.mxu0 0.0
  %538 = vmatpush1.msra.mxu0 0.0
  %539 = vmatprep.subr.mxu0 0.0
  %540 = vmatpush1.msra.mxu0 0.0
  %541 = vmatprep.subr.mxu0 0.0
  %542 = vmatpush1.msra.mxu0 0.0
  %543 = vmatprep.subr.mxu0 0.0
  %544 = vmatpush1.msra.mxu0 0.0
  %545 = vmatprep.subr.mxu0 0.0
  %546 = vmatpush1.msra.mxu0 0.0
  %547 = vmatprep.subr.mxu0 0.0
  %548 = vmatpush1.msra.mxu0 0.0
  %549 = vmatprep.subr.mxu0 0.0
  %550 = vmatpush1.msra.mxu0 0.0
  %551 = vmatprep.subr.mxu0 0.0
  %552 = vmatpush1.msra.mxu0 0.0
  %553 = vmatprep.subr.mxu0 0.0
  %554 = vmatpush1.msra.mxu0 %v485
  %555 = vmatprep.subr.mxu0 0.0
  %556 = vmatpush1.msra.mxu0 %v480
  %557 = vmatprep.subr.mxu0 0.0
  %558 = vmatpush1.msra.mxu0 %v475
  %559 = vmatprep.subr.mxu0 0.0
  %560 = vmatpush1.msra.mxu0 %v470
  %561 = vmatprep.subr.mxu0 0.0
  %562 = vmatpush1.msra.mxu0 %v465
  %563 = vmatprep.subr.mxu0 0.0
  %564 = vmatpush1.msra.mxu0 %v460
  %565 = vmatprep.subr.mxu0 0.0
  %566 = vmatpush1.msra.mxu0 %v455
  %567 = vmatprep.subr.mxu0 0.0
  %568 = vmatpush1.msra.mxu0 %v450
  %569 = vmatprep.subr.mxu0 0.0
  %570 = vmatpush2.msra.mxu0 0.0
  %571 = vmatprep.subr.mxu0 0.0
  %572 = vmatpush2.msra.mxu0 0.0
  %573 = vmatprep.subr.mxu0 0.0
  %574 = vmatpush2.msra.mxu0 0.0
  %575 = vmatprep.subr.mxu0 0.0
  %576 = vmatpush2.msra.mxu0 0.0
  %577 = vmatprep.subr.mxu0 0.0
  %578 = vmatpush2.msra.mxu0 0.0
  %579 = vmatprep.subr.mxu0 0.0
  %580 = vmatpush2.msra.mxu0 0.0
  %581 = vmatprep.subr.mxu0 0.0
  %582 = vmatpush2.msra.mxu0 0.0
  %583 = vmatprep.subr.mxu0 0.0
  %584 = vmatpush2.msra.mxu0 0.0
  %585 = vmatprep.subr.mxu0 0.0
  %586 = vmatpush2.msra.mxu0 0.0
  %587 = vmatprep.subr.mxu0 0.0
  %588 = vmatpush2.msra.mxu0 0.0
  %589 = vmatprep.subr.mxu0 0.0
  %590 = vmatpush2.msra.mxu0 0.0
  %591 = vmatprep.subr.mxu0 0.0
  %592 = vmatpush2.msra.mxu0 0.0
  %593 = vmatprep.subr.mxu0 0.0
  %594 = vmatpush2.msra.mxu0 0.0
  %595 = vmatprep.subr.mxu0 0.0
  %596 = vmatpush2.msra.mxu0 0.0
  %597 = vmatprep.subr.mxu0 0.0
  %598 = vmatpush2.msra.mxu0 0.0
  %599 = vmatprep.subr.mxu0 0.0
  %600 = vmatpush2.msra.mxu0 0.0
  %601 = vmatprep.mubr.f32.mxu0 0.0
  %602 = vmatmul.mubr.f32.gmra.mxu0 %v490
  %v603 = vpop.f32.mrf.mxu0
  %v604 = vadd.f32 0.0, %v603
  %v605 = vpop.f32.mrf.mxu0
  %606 = vmatprep.mubr.f32.mxu0 0.0
  %607 = vmatmul.mubr.f32.gmra.mxu0 %v493
  %v608 = vpop.f32.mrf.mxu0
  %v609 = vadd.f32 0.0, %v608
  %v610 = vpop.f32.mrf.mxu0
  %611 = vmatprep.mubr.f32.mxu0 0.0
  %612 = vmatmul.mubr.f32.gmra.mxu0 %v496
  %v613 = vpop.f32.mrf.mxu0
  %v614 = vadd.f32 0.0, %v613
  %v615 = vpop.f32.mrf.mxu0
  %616 = vmatprep.mubr.f32.mxu0 0.0
  %617 = vmatmul.mubr.f32.gmra.mxu0 %v499
  %v618 = vpop.f32.mrf.mxu0
  %v619 = vadd.f32 0.0, %v618
  %v620 = vpop.f32.mrf.mxu0
  %621 = vmatprep.mubr.f32.mxu0 0.0
  %622 = vmatmul.mubr.f32.gmra.mxu0 %v502
  %v623 = vpop.f32.mrf.mxu0
  %v624 = vadd.f32 0.0, %v623
  %v625 = vpop.f32.mrf.mxu0
  %626 = vmatprep.mubr.f32.mxu0 0.0
  %627 = vmatmul.mubr.f32.gmra.mxu0 %v505
  %v628 = vpop.f32.mrf.mxu0
  %v629 = vadd.f32 0.0, %v628
  %v630 = vpop.f32.mrf.mxu0
  %631 = vmatprep.mubr.f32.mxu0 0.0
  %632 = vmatmul.mubr.f32.gmra.mxu0 %v508
  %v633 = vpop.f32.mrf.mxu0
  %v634 = vadd.f32 0.0, %v633
  %v635 = vpop.f32.mrf.mxu0
  %636 = vmatprep.mubr.f32.mxu0 0.0
  %637 = vmatmul.mubr.f32.gmra.mxu0 %v511
  %v638 = vpop.f32.mrf.mxu0
  %v639 = vadd.f32 0.0, %v638
  %v640 = vpop.f32.mrf.mxu0
  %641 = vmatprep.mubr.f32.mxu0 0.0
  %642 = vmatmul.mubr.f32.gmra.mxu0 %v514
  %v643 = vpop.f32.mrf.mxu0
  %v644 = vadd.f32 0.0, %v643
  %v645 = vpop.f32.mrf.mxu0
  %646 = vmatprep.mubr.f32.mxu0 0.0
  %647 = vmatmul.mubr.f32.gmra.mxu0 %v517
  %v648 = vpop.f32.mrf.mxu0
  %v649 = vadd.f32 0.0, %v648
  %v650 = vpop.f32.mrf.mxu0
  %651 = vmatprep.mubr.f32.mxu0 0.0
  %652 = vmatmul.mubr.f32.gmra.mxu0 %v520
  %v653 = vpop.f32.mrf.mxu0
  %v654 = vadd.f32 0.0, %v653
  %v655 = vpop.f32.mrf.mxu0
  %656 = vmatprep.mubr.f32.mxu0 0.0
  %657 = vmatmul.mubr.f32.gmra.mxu0 %v523
  %v658 = vpop.f32.mrf.mxu0
  %v659 = vadd.f32 0.0, %v658
  %v660 = vpop.f32.mrf.mxu0
  %661 = vmatprep.mubr.f32.mxu0 0.0
  %662 = vmatmul.mubr.f32.gmra.mxu0 %v526
  %v663 = vpop.f32.mrf.mxu0
  %v664 = vadd.f32 0.0, %v663
  %v665 = vpop.f32.mrf.mxu0
  %666 = vmatprep.mubr.f32.mxu0 0.0
  %667 = vmatmul.mubr.f32.gmra.mxu0 %v529
  %v668 = vpop.f32.mrf.mxu0
  %v669 = vadd.f32 0.0, %v668
  %v670 = vpop.f32.mrf.mxu0
  %671 = vmatprep.mubr.f32.mxu0 0.0
  %672 = vmatmul.mubr.f32.gmra.mxu0 %v532
  %v673 = vpop.f32.mrf.mxu0
  %v674 = vadd.f32 0.0, %v673
  %v675 = vpop.f32.mrf.mxu0
  %676 = vmatprep.mubr.f32.mxu0 0.0
  %677 = vmatmul.mubr.f32.gmra.mxu0 %v535
  %v678 = vpop.f32.mrf.mxu0
  %v679 = vadd.f32 0.0, %v678
  %v680 = vpop.f32.mrf.mxu0
  %681 = vdwg.mxu0
  %v682 = vld [vmem:[%s5] sm:$0xff]
  %v683 = vld [vmem:[%s5 + $0x8] sm:$0xff]
  %v684 = vld [vmem:[%s5 + $0x10] sm:$0xff]
  %v685 = vld [vmem:[%s5 + $0x18] sm:$0xff]
  %v686 = vld [vmem:[%s5 + $0x20] sm:$0xff]
  %v687 = vld [vmem:[%s5 + $0x28] sm:$0xff]
  %v688 = vld [vmem:[%s5 + $0x30] sm:$0xff]
  %v689 = vld [vmem:[%s5 + $0x38] sm:$0xff]
  %v690 = vld [vmem:[%s5 + $0x40] sm:$0xff]
  %v691 = vld [vmem:[%s5 + $0x48] sm:$0xff]
  %v692 = vld [vmem:[%s5 + $0x50] sm:$0xff]
  %v693 = vld [vmem:[%s5 + $0x58] sm:$0xff]
  %v694 = vld [vmem:[%s5 + $0x60] sm:$0xff]
  %v695 = vld [vmem:[%s5 + $0x68] sm:$0xff]
  %v696 = vld [vmem:[%s5 + $0x70] sm:$0xff]
  %v697 = vld [vmem:[%s5 + $0x78] sm:$0xff]
  %698 = vset.pattern.permute.xlu0 2
  %699 = vperm.xlu0 %698, %v227
  %v700 = vpop.permute.xlu0 %699
  %702 = vset.pattern.permute.xlu0 2
  %703 = vperm.xlu0 %702, %v228
  %v704 = vpop.permute.xlu0 %703
  %706 = vset.pattern.permute.xlu0 2
  %707 = vperm.xlu0 %706, %v229
  %v708 = vpop.permute.xlu0 %707
  %710 = vset.pattern.permute.xlu0 2
  %711 = vperm.xlu0 %710, %v230
  %v712 = vpop.permute.xlu0 %711
  %715 = vset.pattern.permute.xlu0 2
  %716 = vperm.xlu0 %715, %v231
  %v717 = vpop.permute.xlu0 %716
  %720 = vset.pattern.permute.xlu0 2
  %721 = vperm.xlu0 %720, %v232
  %v722 = vpop.permute.xlu0 %721
  %725 = vset.pattern.permute.xlu0 2
  %726 = vperm.xlu0 %725, %v233
  %v727 = vpop.permute.xlu0 %726
  %730 = vset.pattern.permute.xlu0 2
  %731 = vperm.xlu0 %730, %v234
  %v732 = vpop.permute.xlu0 %731
  %735 = vset.pattern.permute.xlu0 2
  %736 = vperm.xlu0 %735, %v235
  %v737 = vpop.permute.xlu0 %736
  %740 = vset.pattern.permute.xlu0 2
  %741 = vperm.xlu0 %740, %v236
  %v742 = vpop.permute.xlu0 %741
  %745 = vset.pattern.permute.xlu0 2
  %746 = vperm.xlu0 %745, %v237
  %v747 = vpop.permute.xlu0 %746
  %750 = vset.pattern.permute.xlu0 2
  %751 = vperm.xlu0 %750, %v238
  %v752 = vpop.permute.xlu0 %751
  %755 = vset.pattern.permute.xlu0 2
  %756 = vperm.xlu0 %755, %v239
  %v757 = vpop.permute.xlu0 %756
  %760 = vset.pattern.permute.xlu0 2
  %761 = vperm.xlu0 %760, %v240
  %v762 = vpop.permute.xlu0 %761
  %765 = vset.pattern.permute.xlu0 2
  %766 = vperm.xlu0 %765, %v241
  %v767 = vpop.permute.xlu0 %766
  %770 = vset.pattern.permute.xlu0 2
  %771 = vperm.xlu0 %770, %v242
  %v772 = vpop.permute.xlu0 %771
  %774 = vmatprep.subr.mxu0 0.0
  %775 = vmatpush1.msra.mxu0 %v679
  %776 = vmatprep.subr.mxu0 0.0
  %777 = vmatpush1.msra.mxu0 %v674
  %778 = vmatprep.subr.mxu0 0.0
  %779 = vmatpush1.msra.mxu0 %v669
  %780 = vmatprep.subr.mxu0 0.0
  %781 = vmatpush1.msra.mxu0 %v664
  %782 = vmatprep.subr.mxu0 0.0
  %783 = vmatpush1.msra.mxu0 %v659
  %784 = vmatprep.subr.mxu0 0.0
  %785 = vmatpush1.msra.mxu0 %v654
  %786 = vmatprep.subr.mxu0 0.0
  %787 = vmatpush1.msra.mxu0 %v649
  %788 = vmatprep.subr.mxu0 0.0
  %789 = vmatpush1.msra.mxu0 %v644
  %790 = vmatprep.subr.mxu0 0.0
  %791 = vmatpush1.msra.mxu0 %v639
  %792 = vmatprep.subr.mxu0 0.0
  %793 = vmatpush1.msra.mxu0 %v634
  %794 = vmatprep.subr.mxu0 0.0
  %795 = vmatpush1.msra.mxu0 %v629
  %796 = vmatprep.subr.mxu0 0.0
  %797 = vmatpush1.msra.mxu0 %v624
  %798 = vmatprep.subr.mxu0 0.0
  %799 = vmatpush1.msra.mxu0 %v619
  %800 = vmatprep.subr.mxu0 0.0
  %801 = vmatpush1.msra.mxu0 %v614
  %802 = vmatprep.subr.mxu0 0.0
  %803 = vmatpush1.msra.mxu0 %v609
  %804 = vmatprep.subr.mxu0 0.0
  %805 = vmatpush1.msra.mxu0 %v604
  %806 = vmatprep.subr.mxu0 0.0
  %807 = vmatpush2.msra.mxu0 0.0
  %808 = vmatprep.subr.mxu0 0.0
  %809 = vmatpush2.msra.mxu0 0.0
  %810 = vmatprep.subr.mxu0 0.0
  %811 = vmatpush2.msra.mxu0 0.0
  %812 = vmatprep.subr.mxu0 0.0
  %813 = vmatpush2.msra.mxu0 0.0
  %814 = vmatprep.subr.mxu0 0.0
  %815 = vmatpush2.msra.mxu0 0.0
  %816 = vmatprep.subr.mxu0 0.0
  %817 = vmatpush2.msra.mxu0 0.0
  %818 = vmatprep.subr.mxu0 0.0
  %819 = vmatpush2.msra.mxu0 0.0
  %820 = vmatprep.subr.mxu0 0.0
  %821 = vmatpush2.msra.mxu0 0.0
  %822 = vmatprep.subr.mxu0 0.0
  %823 = vmatpush2.msra.mxu0 0.0
  %824 = vmatprep.subr.mxu0 0.0
  %825 = vmatpush2.msra.mxu0 0.0
  %826 = vmatprep.subr.mxu0 0.0
  %827 = vmatpush2.msra.mxu0 0.0
  %828 = vmatprep.subr.mxu0 0.0
  %829 = vmatpush2.msra.mxu0 0.0
  %830 = vmatprep.subr.mxu0 0.0
  %831 = vmatpush2.msra.mxu0 0.0
  %832 = vmatprep.subr.mxu0 0.0
  %833 = vmatpush2.msra.mxu0 0.0
  %834 = vmatprep.subr.mxu0 0.0
  %835 = vmatpush2.msra.mxu0 0.0
  %836 = vmatprep.subr.mxu0 0.0
  %837 = vmatpush2.msra.mxu0 0.0
  %838 = vmatprep.mubr.f32.mxu0 0.0
  %839 = vmatmul.mubr.f32.gmra.mxu0 %v682
  %v840 = vpop.f32.mrf.mxu0
  %v841 = vadd.f32 %v700, %v840
  %v842 = vpop.f32.mrf.mxu0
  %843 = vmatprep.mubr.f32.mxu0 0.0
  %844 = vmatmul.mubr.f32.gmra.mxu0 %v683
  %v845 = vpop.f32.mrf.mxu0
  %v846 = vadd.f32 %v704, %v845
  %v847 = vpop.f32.mrf.mxu0
  %848 = vmatprep.mubr.f32.mxu0 0.0
  %849 = vmatmul.mubr.f32.gmra.mxu0 %v684
  %v850 = vpop.f32.mrf.mxu0
  %v851 = vadd.f32 %v708, %v850
  %v852 = vpop.f32.mrf.mxu0
  %853 = vmatprep.mubr.f32.mxu0 0.0
  %854 = vmatmul.mubr.f32.gmra.mxu0 %v685
  %v855 = vpop.f32.mrf.mxu0
  %v856 = vadd.f32 %v712, %v855
  %v857 = vpop.f32.mrf.mxu0
  %858 = vmatprep.mubr.f32.mxu0 0.0
  %859 = vmatmul.mubr.f32.gmra.mxu0 %v686
  %v860 = vpop.f32.mrf.mxu0
  %v861 = vadd.f32 %v717, %v860
  %v862 = vpop.f32.mrf.mxu0
  %863 = vmatprep.mubr.f32.mxu0 0.0
  %864 = vmatmul.mubr.f32.gmra.mxu0 %v687
  %v865 = vpop.f32.mrf.mxu0
  %v866 = vadd.f32 %v722, %v865
  %v867 = vpop.f32.mrf.mxu0
  %868 = vmatprep.mubr.f32.mxu0 0.0
  %869 = vmatmul.mubr.f32.gmra.mxu0 %v688
  %v870 = vpop.f32.mrf.mxu0
  %v871 = vadd.f32 %v727, %v870
  %v872 = vpop.f32.mrf.mxu0
  %873 = vmatprep.mubr.f32.mxu0 0.0
  %874 = vmatmul.mubr.f32.gmra.mxu0 %v689
  %v875 = vpop.f32.mrf.mxu0
  %v876 = vadd.f32 %v732, %v875
  %v877 = vpop.f32.mrf.mxu0
  %878 = vmatprep.mubr.f32.mxu0 0.0
  %879 = vmatmul.mubr.f32.gmra.mxu0 %v690
  %v880 = vpop.f32.mrf.mxu0
  %v881 = vadd.f32 %v737, %v880
  %v882 = vpop.f32.mrf.mxu0
  %883 = vmatprep.mubr.f32.mxu0 0.0
  %884 = vmatmul.mubr.f32.gmra.mxu0 %v691
  %v885 = vpop.f32.mrf.mxu0
  %v886 = vadd.f32 %v742, %v885
  %v887 = vpop.f32.mrf.mxu0
  %888 = vmatprep.mubr.f32.mxu0 0.0
  %889 = vmatmul.mubr.f32.gmra.mxu0 %v692
  %v890 = vpop.f32.mrf.mxu0
  %v891 = vadd.f32 %v747, %v890
  %v892 = vpop.f32.mrf.mxu0
  %893 = vmatprep.mubr.f32.mxu0 0.0
  %894 = vmatmul.mubr.f32.gmra.mxu0 %v693
  %v895 = vpop.f32.mrf.mxu0
  %v896 = vadd.f32 %v752, %v895
  %v897 = vpop.f32.mrf.mxu0
  %898 = vmatprep.mubr.f32.mxu0 0.0
  %899 = vmatmul.mubr.f32.gmra.mxu0 %v694
  %v900 = vpop.f32.mrf.mxu0
  %v901 = vadd.f32 %v757, %v900
  %v902 = vpop.f32.mrf.mxu0
  %903 = vmatprep.mubr.f32.mxu0 0.0
  %904 = vmatmul.mubr.f32.gmra.mxu0 %v695
  %v905 = vpop.f32.mrf.mxu0
  %v906 = vadd.f32 %v762, %v905
  %v907 = vpop.f32.mrf.mxu0
  %908 = vmatprep.mubr.f32.mxu0 0.0
  %909 = vmatmul.mubr.f32.gmra.mxu0 %v696
  %v910 = vpop.f32.mrf.mxu0
  %v911 = vadd.f32 %v767, %v910
  %v912 = vpop.f32.mrf.mxu0
  %913 = vmatprep.mubr.f32.mxu0 0.0
  %914 = vmatmul.mubr.f32.gmra.mxu0 %v697
  %v915 = vpop.f32.mrf.mxu0
  %v916 = vadd.f32 %v772, %v915
  %v917 = vpop.f32.mrf.mxu0
  %918 = vdwg.mxu0
  %v920 = vsel %vm488, %v841, 0
  %v923 = vsel %vm488, %v846, 0
  %v926 = vsel %vm488, %v851, 0
  %v929 = vsel %vm488, %v856, 0
  %v932 = vsel %vm488, %v861, 0
  %v935 = vsel %vm488, %v866, 0
  %v938 = vsel %vm488, %v871, 0
  %v941 = vsel %vm488, %v876, 0
  %v944 = vsel %vm488, %v881, 0
  %v947 = vsel %vm488, %v886, 0
  %v950 = vsel %vm488, %v891, 0
  %v953 = vsel %vm488, %v896, 0
  %v956 = vsel %vm488, %v901, 0
  %v959 = vsel %vm488, %v906, 0
  %v962 = vsel %vm488, %v911, 0
  %v965 = vsel %vm488, %v916, 0
  %967 = vmatprep.subr.mxu0 0.0
  %968 = vmatpush1.msra.mxu0 0.0
  %969 = vmatprep.subr.mxu0 0.0
  %970 = vmatpush1.msra.mxu0 0.0
  %971 = vmatprep.subr.mxu0 0.0
  %972 = vmatpush1.msra.mxu0 0.0
  %973 = vmatprep.subr.mxu0 0.0
  %974 = vmatpush1.msra.mxu0 0.0
  %975 = vmatprep.subr.mxu0 0.0
  %976 = vmatpush1.msra.mxu0 0.0
  %977 = vmatprep.subr.mxu0 0.0
  %978 = vmatpush1.msra.mxu0 0.0
  %979 = vmatprep.subr.mxu0 0.0
  %980 = vmatpush1.msra.mxu0 0.0
  %981 = vmatprep.subr.mxu0 0.0
  %982 = vmatpush1.msra.mxu0 0.0
  %983 = vmatprep.subr.mxu0 0.0
  %984 = vmatpush1.msra.mxu0 %v350
  %985 = vmatprep.subr.mxu0 0.0
  %986 = vmatpush1.msra.mxu0 %v349
  %987 = vmatprep.subr.mxu0 0.0
  %988 = vmatpush1.msra.mxu0 %v348
  %989 = vmatprep.subr.mxu0 0.0
  %990 = vmatpush1.msra.mxu0 %v347
  %991 = vmatprep.subr.mxu0 0.0
  %992 = vmatpush1.msra.mxu0 %v346
  %993 = vmatprep.subr.mxu0 0.0
  %994 = vmatpush1.msra.mxu0 %v345
  %995 = vmatprep.subr.mxu0 0.0
  %996 = vmatpush1.msra.mxu0 %v344
  %997 = vmatprep.subr.mxu0 0.0
  %998 = vmatpush1.msra.mxu0 %v343
  %999 = vmatprep.subr.mxu0 0.0
  %1000 = vmatpush2.msra.mxu0 0.0
  %1001 = vmatprep.subr.mxu0 0.0
  %1002 = vmatpush2.msra.mxu0 0.0
  %1003 = vmatprep.subr.mxu0 0.0
  %1004 = vmatpush2.msra.mxu0 0.0
  %1005 = vmatprep.subr.mxu0 0.0
  %1006 = vmatpush2.msra.mxu0 0.0
  %1007 = vmatprep.subr.mxu0 0.0
  %1008 = vmatpush2.msra.mxu0 0.0
  %1009 = vmatprep.subr.mxu0 0.0
  %1010 = vmatpush2.msra.mxu0 0.0
  %1011 = vmatprep.subr.mxu0 0.0
  %1012 = vmatpush2.msra.mxu0 0.0
  %1013 = vmatprep.subr.mxu0 0.0
  %1014 = vmatpush2.msra.mxu0 0.0
  %1015 = vmatprep.subr.mxu0 0.0
  %1016 = vmatpush2.msra.mxu0 0.0
  %1017 = vmatprep.subr.mxu0 0.0
  %1018 = vmatpush2.msra.mxu0 0.0
  %1019 = vmatprep.subr.mxu0 0.0
  %1020 = vmatpush2.msra.mxu0 0.0
  %1021 = vmatprep.subr.mxu0 0.0
  %1022 = vmatpush2.msra.mxu0 0.0
  %1023 = vmatprep.subr.mxu0 0.0
  %1024 = vmatpush2.msra.mxu0 0.0
  %1025 = vmatprep.subr.mxu0 0.0
  %1026 = vmatpush2.msra.mxu0 0.0
  %1027 = vmatprep.subr.mxu0 0.0
  %1028 = vmatpush2.msra.mxu0 0.0
  %1029 = vmatprep.subr.mxu0 0.0
  %1030 = vmatpush2.msra.mxu0 0.0
  %1031 = vmatprep.mubr.f32.mxu0 0.0
  %1032 = vmatmul.mubr.f32.gmra.mxu0 %v920
  %v1033 = vpop.f32.mrf.mxu0
  %v1034 = vadd.f32 0.0, %v1033
  %v1035 = vpop.f32.mrf.mxu0
  %1036 = vmatprep.mubr.f32.mxu0 0.0
  %1037 = vmatmul.mubr.f32.gmra.mxu0 %v923
  %v1038 = vpop.f32.mrf.mxu0
  %v1039 = vadd.f32 0.0, %v1038
  %v1040 = vpop.f32.mrf.mxu0
  %1041 = vmatprep.mubr.f32.mxu0 0.0
  %1042 = vmatmul.mubr.f32.gmra.mxu0 %v926
  %v1043 = vpop.f32.mrf.mxu0
  %v1044 = vadd.f32 0.0, %v1043
  %v1045 = vpop.f32.mrf.mxu0
  %1046 = vmatprep.mubr.f32.mxu0 0.0
  %1047 = vmatmul.mubr.f32.gmra.mxu0 %v929
  %v1048 = vpop.f32.mrf.mxu0
  %v1049 = vadd.f32 0.0, %v1048
  %v1050 = vpop.f32.mrf.mxu0
  %1051 = vmatprep.mubr.f32.mxu0 0.0
  %1052 = vmatmul.mubr.f32.gmra.mxu0 %v932
  %v1053 = vpop.f32.mrf.mxu0
  %v1054 = vadd.f32 0.0, %v1053
  %v1055 = vpop.f32.mrf.mxu0
  %1056 = vmatprep.mubr.f32.mxu0 0.0
  %1057 = vmatmul.mubr.f32.gmra.mxu0 %v935
  %v1058 = vpop.f32.mrf.mxu0
  %v1059 = vadd.f32 0.0, %v1058
  %v1060 = vpop.f32.mrf.mxu0
  %1061 = vmatprep.mubr.f32.mxu0 0.0
  %1062 = vmatmul.mubr.f32.gmra.mxu0 %v938
  %v1063 = vpop.f32.mrf.mxu0
  %v1064 = vadd.f32 0.0, %v1063
  %v1065 = vpop.f32.mrf.mxu0
  %1066 = vmatprep.mubr.f32.mxu0 0.0
  %1067 = vmatmul.mubr.f32.gmra.mxu0 %v941
  %v1068 = vpop.f32.mrf.mxu0
  %v1069 = vadd.f32 0.0, %v1068
  %v1070 = vpop.f32.mrf.mxu0
  %1071 = vmatprep.mubr.f32.mxu0 0.0
  %1072 = vmatmul.mubr.f32.gmra.mxu0 %v944
  %v1073 = vpop.f32.mrf.mxu0
  %v1074 = vadd.f32 0.0, %v1073
  %v1075 = vpop.f32.mrf.mxu0
  %1076 = vmatprep.mubr.f32.mxu0 0.0
  %1077 = vmatmul.mubr.f32.gmra.mxu0 %v947
  %v1078 = vpop.f32.mrf.mxu0
  %v1079 = vadd.f32 0.0, %v1078
  %v1080 = vpop.f32.mrf.mxu0
  %1081 = vmatprep.mubr.f32.mxu0 0.0
  %1082 = vmatmul.mubr.f32.gmra.mxu0 %v950
  %v1083 = vpop.f32.mrf.mxu0
  %v1084 = vadd.f32 0.0, %v1083
  %v1085 = vpop.f32.mrf.mxu0
  %1086 = vmatprep.mubr.f32.mxu0 0.0
  %1087 = vmatmul.mubr.f32.gmra.mxu0 %v953
  %v1088 = vpop.f32.mrf.mxu0
  %v1089 = vadd.f32 0.0, %v1088
  %v1090 = vpop.f32.mrf.mxu0
  %1091 = vmatprep.mubr.f32.mxu0 0.0
  %1092 = vmatmul.mubr.f32.gmra.mxu0 %v956
  %v1093 = vpop.f32.mrf.mxu0
  %v1094 = vadd.f32 0.0, %v1093
  %v1095 = vpop.f32.mrf.mxu0
  %1096 = vmatprep.mubr.f32.mxu0 0.0
  %1097 = vmatmul.mubr.f32.gmra.mxu0 %v959
  %v1098 = vpop.f32.mrf.mxu0
  %v1099 = vadd.f32 0.0, %v1098
  %v1100 = vpop.f32.mrf.mxu0
  %1101 = vmatprep.mubr.f32.mxu0 0.0
  %1102 = vmatmul.mubr.f32.gmra.mxu0 %v962
  %v1103 = vpop.f32.mrf.mxu0
  %v1104 = vadd.f32 0.0, %v1103
  %v1105 = vpop.f32.mrf.mxu0
  %1106 = vmatprep.mubr.f32.mxu0 0.0
  %1107 = vmatmul.mubr.f32.gmra.mxu0 %v965
  %v1108 = vpop.f32.mrf.mxu0
  %v1109 = vadd.f32 0.0, %v1108
  %v1110 = vpop.f32.mrf.mxu0
  %1111 = vdwg.mxu0
  %v1112 = vld [vmem:[%s6] sm:$0xff]
  %v1113 = vld [vmem:[%s6 + $0x8] sm:$0xff]
  %v1114 = vld [vmem:[%s6 + $0x10] sm:$0xff]
  %v1115 = vld [vmem:[%s6 + $0x18] sm:$0xff]
  %v1116 = vld [vmem:[%s6 + $0x20] sm:$0xff]
  %v1117 = vld [vmem:[%s6 + $0x28] sm:$0xff]
  %v1118 = vld [vmem:[%s6 + $0x30] sm:$0xff]
  %v1119 = vld [vmem:[%s6 + $0x38] sm:$0xff]
  %v1120 = vld [vmem:[%s6 + $0x40] sm:$0xff]
  %v1121 = vld [vmem:[%s6 + $0x48] sm:$0xff]
  %v1122 = vld [vmem:[%s6 + $0x50] sm:$0xff]
  %v1123 = vld [vmem:[%s6 + $0x58] sm:$0xff]
  %v1124 = vld [vmem:[%s6 + $0x60] sm:$0xff]
  %v1125 = vld [vmem:[%s6 + $0x68] sm:$0xff]
  %v1126 = vld [vmem:[%s6 + $0x70] sm:$0xff]
  %v1127 = vld [vmem:[%s6 + $0x78] sm:$0xff]
  %v1128 = vld [vmem:[%s6 + $0x80] sm:$0xff]
  %v1129 = vld [vmem:[%s6 + $0x88] sm:$0xff]
  %v1130 = vld [vmem:[%s6 + $0x90] sm:$0xff]
  %v1131 = vld [vmem:[%s6 + $0x98] sm:$0xff]
  %v1132 = vld [vmem:[%s6 + $0xa0] sm:$0xff]
  %v1133 = vld [vmem:[%s6 + $0xa8] sm:$0xff]
  %v1134 = vld [vmem:[%s6 + $0xb0] sm:$0xff]
  %v1135 = vld [vmem:[%s6 + $0xb8] sm:$0xff]
  %v1136 = vld [vmem:[%s6 + $0xc0] sm:$0xff]
  %v1137 = vld [vmem:[%s6 + $0xc8] sm:$0xff]
  %v1138 = vld [vmem:[%s6 + $0xd0] sm:$0xff]
  %v1139 = vld [vmem:[%s6 + $0xd8] sm:$0xff]
  %v1140 = vld [vmem:[%s6 + $0xe0] sm:$0xff]
  %v1141 = vld [vmem:[%s6 + $0xe8] sm:$0xff]
  %v1142 = vld [vmem:[%s6 + $0xf0] sm:$0xff]
  %v1143 = vld [vmem:[%s6 + $0xf8] sm:$0xff]
  %v1144 = vld [vmem:[%s6 + $0x100] sm:$0xff]
  %v1145 = vld [vmem:[%s6 + $0x108] sm:$0xff]
  %v1146 = vld [vmem:[%s6 + $0x110] sm:$0xff]
  %v1147 = vld [vmem:[%s6 + $0x118] sm:$0xff]
  %v1148 = vld [vmem:[%s6 + $0x120] sm:$0xff]
  %v1149 = vld [vmem:[%s6 + $0x128] sm:$0xff]
  %v1150 = vld [vmem:[%s6 + $0x130] sm:$0xff]
  %v1151 = vld [vmem:[%s6 + $0x138] sm:$0xff]
  %v1152 = vld [vmem:[%s6 + $0x140] sm:$0xff]
  %v1153 = vld [vmem:[%s6 + $0x148] sm:$0xff]
  %v1154 = vld [vmem:[%s6 + $0x150] sm:$0xff]
  %v1155 = vld [vmem:[%s6 + $0x158] sm:$0xff]
  %v1156 = vld [vmem:[%s6 + $0x160] sm:$0xff]
  %v1157 = vld [vmem:[%s6 + $0x168] sm:$0xff]
  %v1158 = vld [vmem:[%s6 + $0x170] sm:$0xff]
  %v1159 = vld [vmem:[%s6 + $0x178] sm:$0xff]
  %v1160 = vld [vmem:[%s6 + $0x180] sm:$0xff]
  %v1161 = vld [vmem:[%s6 + $0x188] sm:$0xff]
  %v1162 = vld [vmem:[%s6 + $0x190] sm:$0xff]
  %v1163 = vld [vmem:[%s6 + $0x198] sm:$0xff]
  %v1164 = vld [vmem:[%s6 + $0x1a0] sm:$0xff]
  %v1165 = vld [vmem:[%s6 + $0x1a8] sm:$0xff]
  %v1166 = vld [vmem:[%s6 + $0x1b0] sm:$0xff]
  %v1167 = vld [vmem:[%s6 + $0x1b8] sm:$0xff]
  %v1168 = vld [vmem:[%s6 + $0x1c0] sm:$0xff]
  %v1169 = vld [vmem:[%s6 + $0x1c8] sm:$0xff]
  %v1170 = vld [vmem:[%s6 + $0x1d0] sm:$0xff]
  %v1171 = vld [vmem:[%s6 + $0x1d8] sm:$0xff]
  %v1172 = vld [vmem:[%s6 + $0x1e0] sm:$0xff]
  %v1173 = vld [vmem:[%s6 + $0x1e8] sm:$0xff]
  %v1174 = vld [vmem:[%s6 + $0x1f0] sm:$0xff]
  %v1175 = vld [vmem:[%s6 + $0x1f8] sm:$0xff]
  %v1176 = vld [vmem:[%s8] sm:$0xff]
  %v1177 = vmul.f32 %v1112, %v1034
  %v1178 = vmul.f32 %v1113, %v1039
  %v1179 = vmul.f32 %v1114, %v1044
  %v1180 = vmul.f32 %v1115, %v1049
  %v1181 = vmul.f32 %v1116, %v1054
  %v1182 = vmul.f32 %v1117, %v1059
  %v1183 = vmul.f32 %v1118, %v1064
  %v1184 = vmul.f32 %v1119, %v1069
  %v1185 = vmul.f32 %v1120, %v1034
  %v1186 = vmul.f32 %v1121, %v1039
  %v1187 = vmul.f32 %v1122, %v1044
  %v1188 = vmul.f32 %v1123, %v1049
  %v1189 = vmul.f32 %v1124, %v1054
  %v1190 = vmul.f32 %v1125, %v1059
  %v1191 = vmul.f32 %v1126, %v1064
  %v1192 = vmul.f32 %v1127, %v1069
  %v1193 = vmul.f32 %v1128, %v1034
  %v1194 = vmul.f32 %v1129, %v1039
  %v1195 = vmul.f32 %v1130, %v1044
  %v1196 = vmul.f32 %v1131, %v1049
  %v1197 = vmul.f32 %v1132, %v1054
  %v1198 = vmul.f32 %v1133, %v1059
  %v1199 = vmul.f32 %v1134, %v1064
  %v1200 = vmul.f32 %v1135, %v1069
  %v1201 = vmul.f32 %v1136, %v1034
  %v1202 = vmul.f32 %v1137, %v1039
  %v1203 = vmul.f32 %v1138, %v1044
  %v1204 = vmul.f32 %v1139, %v1049
  %v1205 = vmul.f32 %v1140, %v1054
  %v1206 = vmul.f32 %v1141, %v1059
  %v1207 = vmul.f32 %v1142, %v1064
  %v1208 = vmul.f32 %v1143, %v1069
  %v1209 = vmul.f32 %v1144, %v1034
  %v1210 = vmul.f32 %v1145, %v1039
  %v1211 = vmul.f32 %v1146, %v1044
  %v1212 = vmul.f32 %v1147, %v1049
  %v1213 = vmul.f32 %v1148, %v1054
  %v1214 = vmul.f32 %v1149, %v1059
  %v1215 = vmul.f32 %v1150, %v1064
  %v1216 = vmul.f32 %v1151, %v1069
  %v1217 = vmul.f32 %v1152, %v1034
  %v1218 = vmul.f32 %v1153, %v1039
  %v1219 = vmul.f32 %v1154, %v1044
  %v1220 = vmul.f32 %v1155, %v1049
  %v1221 = vmul.f32 %v1156, %v1054
  %v1222 = vmul.f32 %v1157, %v1059
  %v1223 = vmul.f32 %v1158, %v1064
  %v1224 = vmul.f32 %v1159, %v1069
  %v1225 = vmul.f32 %v1160, %v1034
  %v1226 = vmul.f32 %v1161, %v1039
  %v1227 = vmul.f32 %v1162, %v1044
  %v1228 = vmul.f32 %v1163, %v1049
  %v1229 = vmul.f32 %v1164, %v1054
  %v1230 = vmul.f32 %v1165, %v1059
  %v1231 = vmul.f32 %v1166, %v1064
  %v1232 = vmul.f32 %v1167, %v1069
  %v1233 = vmul.f32 %v1168, %v1034
  %v1234 = vmul.f32 %v1169, %v1039
  %v1235 = vmul.f32 %v1170, %v1044
  %v1236 = vmul.f32 %v1171, %v1049
  %v1237 = vmul.f32 %v1172, %v1054
  %v1238 = vmul.f32 %v1173, %v1059
  %v1239 = vmul.f32 %v1174, %v1064
  %v1240 = vmul.f32 %v1175, %v1069
  %vm1241 = vcmask 130048
  %v1242 = vsel %vm1241, %v1177, 0.0
  %1243 = vadd.xlane.f32.xlu0 %v1242
  %v1244 = vpop.xlane.xlu0 %1243
  %v1245 = vsel %vm1241, %v1178, 0.0
  %1246 = vadd.xlane.f32.xlu0 %v1245
  %v1247 = vpop.xlane.xlu0 %1246
  %v1248 = vsel %vm1241, %v1179, 0.0
  %1249 = vadd.xlane.f32.xlu0 %v1248
  %v1250 = vpop.xlane.xlu0 %1249
  %v1251 = vsel %vm1241, %v1180, 0.0
  %1252 = vadd.xlane.f32.xlu0 %v1251
  %v1253 = vpop.xlane.xlu0 %1252
  %v1254 = vsel %vm1241, %v1181, 0.0
  %1255 = vadd.xlane.f32.xlu0 %v1254
  %v1256 = vpop.xlane.xlu0 %1255
  %v1257 = vsel %vm1241, %v1182, 0.0
  %1258 = vadd.xlane.f32.xlu0 %v1257
  %v1259 = vpop.xlane.xlu0 %1258
  %v1260 = vsel %vm1241, %v1183, 0.0
  %1261 = vadd.xlane.f32.xlu0 %v1260
  %v1262 = vpop.xlane.xlu0 %1261
  %v1263 = vsel %vm1241, %v1184, 0.0
  %1264 = vadd.xlane.f32.xlu0 %v1263
  %v1265 = vpop.xlane.xlu0 %1264
  %v1266 = vsel %vm1241, %v1185, 0.0
  %1267 = vadd.xlane.f32.xlu0 %v1266
  %v1268 = vpop.xlane.xlu0 %1267
  %v1269 = vsel %vm1241, %v1186, 0.0
  %1270 = vadd.xlane.f32.xlu0 %v1269
  %v1271 = vpop.xlane.xlu0 %1270
  %v1272 = vsel %vm1241, %v1187, 0.0
  %1273 = vadd.xlane.f32.xlu0 %v1272
  %v1274 = vpop.xlane.xlu0 %1273
  %v1275 = vsel %vm1241, %v1188, 0.0
  %1276 = vadd.xlane.f32.xlu0 %v1275
  %v1277 = vpop.xlane.xlu0 %1276
  %v1278 = vsel %vm1241, %v1189, 0.0
  %1279 = vadd.xlane.f32.xlu0 %v1278
  %v1280 = vpop.xlane.xlu0 %1279
  %v1281 = vsel %vm1241, %v1190, 0.0
  %1282 = vadd.xlane.f32.xlu0 %v1281
  %v1283 = vpop.xlane.xlu0 %1282
  %v1284 = vsel %vm1241, %v1191, 0.0
  %1285 = vadd.xlane.f32.xlu0 %v1284
  %v1286 = vpop.xlane.xlu0 %1285
  %v1287 = vsel %vm1241, %v1192, 0.0
  %1288 = vadd.xlane.f32.xlu0 %v1287
  %v1289 = vpop.xlane.xlu0 %1288
  %v1290 = vsel %vm1241, %v1193, 0.0
  %1291 = vadd.xlane.f32.xlu0 %v1290
  %v1292 = vpop.xlane.xlu0 %1291
  %v1293 = vsel %vm1241, %v1194, 0.0
  %1294 = vadd.xlane.f32.xlu0 %v1293
  %v1295 = vpop.xlane.xlu0 %1294
  %v1296 = vsel %vm1241, %v1195, 0.0
  %1297 = vadd.xlane.f32.xlu0 %v1296
  %v1298 = vpop.xlane.xlu0 %1297
  %v1299 = vsel %vm1241, %v1196, 0.0
  %1300 = vadd.xlane.f32.xlu0 %v1299
  %v1301 = vpop.xlane.xlu0 %1300
  %v1302 = vsel %vm1241, %v1197, 0.0
  %1303 = vadd.xlane.f32.xlu0 %v1302
  %v1304 = vpop.xlane.xlu0 %1303
  %v1305 = vsel %vm1241, %v1198, 0.0
  %1306 = vadd.xlane.f32.xlu0 %v1305
  %v1307 = vpop.xlane.xlu0 %1306
  %v1308 = vsel %vm1241, %v1199, 0.0
  %1309 = vadd.xlane.f32.xlu0 %v1308
  %v1310 = vpop.xlane.xlu0 %1309
  %v1311 = vsel %vm1241, %v1200, 0.0
  %1312 = vadd.xlane.f32.xlu0 %v1311
  %v1313 = vpop.xlane.xlu0 %1312
  %v1314 = vsel %vm1241, %v1201, 0.0
  %1315 = vadd.xlane.f32.xlu0 %v1314
  %v1316 = vpop.xlane.xlu0 %1315
  %v1317 = vsel %vm1241, %v1202, 0.0
  %1318 = vadd.xlane.f32.xlu0 %v1317
  %v1319 = vpop.xlane.xlu0 %1318
  %v1320 = vsel %vm1241, %v1203, 0.0
  %1321 = vadd.xlane.f32.xlu0 %v1320
  %v1322 = vpop.xlane.xlu0 %1321
  %v1323 = vsel %vm1241, %v1204, 0.0
  %1324 = vadd.xlane.f32.xlu0 %v1323
  %v1325 = vpop.xlane.xlu0 %1324
  %v1326 = vsel %vm1241, %v1205, 0.0
  %1327 = vadd.xlane.f32.xlu0 %v1326
  %v1328 = vpop.xlane.xlu0 %1327
  %v1329 = vsel %vm1241, %v1206, 0.0
  %1330 = vadd.xlane.f32.xlu0 %v1329
  %v1331 = vpop.xlane.xlu0 %1330
  %v1332 = vsel %vm1241, %v1207, 0.0
  %1333 = vadd.xlane.f32.xlu0 %v1332
  %v1334 = vpop.xlane.xlu0 %1333
  %v1335 = vsel %vm1241, %v1208, 0.0
  %1336 = vadd.xlane.f32.xlu0 %v1335
  %v1337 = vpop.xlane.xlu0 %1336
  %v1338 = vsel %vm1241, %v1209, 0.0
  %1339 = vadd.xlane.f32.xlu0 %v1338
  %v1340 = vpop.xlane.xlu0 %1339
  %v1341 = vsel %vm1241, %v1210, 0.0
  %1342 = vadd.xlane.f32.xlu0 %v1341
  %v1343 = vpop.xlane.xlu0 %1342
  %v1344 = vsel %vm1241, %v1211, 0.0
  %1345 = vadd.xlane.f32.xlu0 %v1344
  %v1346 = vpop.xlane.xlu0 %1345
  %v1347 = vsel %vm1241, %v1212, 0.0
  %1348 = vadd.xlane.f32.xlu0 %v1347
  %v1349 = vpop.xlane.xlu0 %1348
  %v1350 = vsel %vm1241, %v1213, 0.0
  %1351 = vadd.xlane.f32.xlu0 %v1350
  %v1352 = vpop.xlane.xlu0 %1351
  %v1353 = vsel %vm1241, %v1214, 0.0
  %1354 = vadd.xlane.f32.xlu0 %v1353
  %v1355 = vpop.xlane.xlu0 %1354
  %v1356 = vsel %vm1241, %v1215, 0.0
  %1357 = vadd.xlane.f32.xlu0 %v1356
  %v1358 = vpop.xlane.xlu0 %1357
  %v1359 = vsel %vm1241, %v1216, 0.0
  %1360 = vadd.xlane.f32.xlu0 %v1359
  %v1361 = vpop.xlane.xlu0 %1360
  %v1362 = vsel %vm1241, %v1217, 0.0
  %1363 = vadd.xlane.f32.xlu0 %v1362
  %v1364 = vpop.xlane.xlu0 %1363
  %v1365 = vsel %vm1241, %v1218, 0.0
  %1366 = vadd.xlane.f32.xlu0 %v1365
  %v1367 = vpop.xlane.xlu0 %1366
  %v1368 = vsel %vm1241, %v1219, 0.0
  %1369 = vadd.xlane.f32.xlu0 %v1368
  %v1370 = vpop.xlane.xlu0 %1369
  %v1371 = vsel %vm1241, %v1220, 0.0
  %1372 = vadd.xlane.f32.xlu0 %v1371
  %v1373 = vpop.xlane.xlu0 %1372
  %v1374 = vsel %vm1241, %v1221, 0.0
  %1375 = vadd.xlane.f32.xlu0 %v1374
  %v1376 = vpop.xlane.xlu0 %1375
  %v1377 = vsel %vm1241, %v1222, 0.0
  %1378 = vadd.xlane.f32.xlu0 %v1377
  %v1379 = vpop.xlane.xlu0 %1378
  %v1380 = vsel %vm1241, %v1223, 0.0
  %1381 = vadd.xlane.f32.xlu0 %v1380
  %v1382 = vpop.xlane.xlu0 %1381
  %v1383 = vsel %vm1241, %v1224, 0.0
  %1384 = vadd.xlane.f32.xlu0 %v1383
  %v1385 = vpop.xlane.xlu0 %1384
  %v1386 = vsel %vm1241, %v1225, 0.0
  %1387 = vadd.xlane.f32.xlu0 %v1386
  %v1388 = vpop.xlane.xlu0 %1387
  %v1389 = vsel %vm1241, %v1226, 0.0
  %1390 = vadd.xlane.f32.xlu0 %v1389
  %v1391 = vpop.xlane.xlu0 %1390
  %v1392 = vsel %vm1241, %v1227, 0.0
  %1393 = vadd.xlane.f32.xlu0 %v1392
  %v1394 = vpop.xlane.xlu0 %1393
  %v1395 = vsel %vm1241, %v1228, 0.0
  %1396 = vadd.xlane.f32.xlu0 %v1395
  %v1397 = vpop.xlane.xlu0 %1396
  %v1398 = vsel %vm1241, %v1229, 0.0
  %1399 = vadd.xlane.f32.xlu0 %v1398
  %v1400 = vpop.xlane.xlu0 %1399
  %v1401 = vsel %vm1241, %v1230, 0.0
  %1402 = vadd.xlane.f32.xlu0 %v1401
  %v1403 = vpop.xlane.xlu0 %1402
  %v1404 = vsel %vm1241, %v1231, 0.0
  %1405 = vadd.xlane.f32.xlu0 %v1404
  %v1406 = vpop.xlane.xlu0 %1405
  %v1407 = vsel %vm1241, %v1232, 0.0
  %1408 = vadd.xlane.f32.xlu0 %v1407
  %v1409 = vpop.xlane.xlu0 %1408
  %v1410 = vsel %vm1241, %v1233, 0.0
  %1411 = vadd.xlane.f32.xlu0 %v1410
  %v1412 = vpop.xlane.xlu0 %1411
  %v1413 = vsel %vm1241, %v1234, 0.0
  %1414 = vadd.xlane.f32.xlu0 %v1413
  %v1415 = vpop.xlane.xlu0 %1414
  %v1416 = vsel %vm1241, %v1235, 0.0
  %1417 = vadd.xlane.f32.xlu0 %v1416
  %v1418 = vpop.xlane.xlu0 %1417
  %v1419 = vsel %vm1241, %v1236, 0.0
  %1420 = vadd.xlane.f32.xlu0 %v1419
  %v1421 = vpop.xlane.xlu0 %1420
  %v1422 = vsel %vm1241, %v1237, 0.0
  %1423 = vadd.xlane.f32.xlu0 %v1422
  %v1424 = vpop.xlane.xlu0 %1423
  %v1425 = vsel %vm1241, %v1238, 0.0
  %1426 = vadd.xlane.f32.xlu0 %v1425
  %v1427 = vpop.xlane.xlu0 %1426
  %v1428 = vsel %vm1241, %v1239, 0.0
  %1429 = vadd.xlane.f32.xlu0 %v1428
  %v1430 = vpop.xlane.xlu0 %1429
  %v1431 = vsel %vm1241, %v1240, 0.0
  %1432 = vadd.xlane.f32.xlu0 %v1431
  %v1433 = vpop.xlane.xlu0 %1432
  %v1498 = vlaneseq
  %v1499 = vand.u32 %v1498, 127
  %v1500 = vlaneseq
  %v1501 = vshrl.u32 %v1500, 7
  %v1502 = vsub.s32 %v1499, %v1501
  %v1503 = vrot.slane %v1244, %v1502
  %v1504 = vadd.s32 %v1499, 4294967288
  %v1505 = vlaneseq
  %v1506 = vshrl.u32 %v1505, 7
  %v1507 = vsub.s32 %v1504, %v1506
  %v1508 = vrot.slane %v1247, %v1507
  %vm1509 = vcmask 130112
  %v1510 = vsel %vm1509, %v1508, %v1503
  %v1511 = vadd.s32 %v1499, 4294967280
  %v1512 = vlaneseq
  %v1513 = vshrl.u32 %v1512, 7
  %v1514 = vsub.s32 %v1511, %v1513
  %v1515 = vrot.slane %v1250, %v1514
  %vm1516 = vcmask 195712
  %v1517 = vsel %vm1516, %v1515, %v1510
  %v1518 = vadd.s32 %v1499, 4294967272
  %v1519 = vlaneseq
  %v1520 = vshrl.u32 %v1519, 7
  %v1521 = vsub.s32 %v1518, %v1520
  %v1522 = vrot.slane %v1253, %v1521
  %vm1523 = vcmask 261312
  %v1524 = vsel %vm1523, %v1522, %v1517
  %v1525 = vadd.s32 %v1499, 4294967264
  %v1526 = vlaneseq
  %v1527 = vshrl.u32 %v1526, 7
  %v1528 = vsub.s32 %v1525, %v1527
  %v1529 = vrot.slane %v1256, %v1528
  %vm1530 = vcmask 326912
  %v1531 = vsel %vm1530, %v1529, %v1524
  %v1532 = vadd.s32 %v1499, 4294967256
  %v1533 = vlaneseq
  %v1534 = vshrl.u32 %v1533, 7
  %v1535 = vsub.s32 %v1532, %v1534
  %v1536 = vrot.slane %v1259, %v1535
  %vm1537 = vcmask 392512
  %v1538 = vsel %vm1537, %v1536, %v1531
  %v1539 = vadd.s32 %v1499, 4294967248
  %v1540 = vlaneseq
  %v1541 = vshrl.u32 %v1540, 7
  %v1542 = vsub.s32 %v1539, %v1541
  %v1543 = vrot.slane %v1262, %v1542
  %vm1544 = vcmask 458112
  %v1545 = vsel %vm1544, %v1543, %v1538
  %v1546 = vadd.s32 %v1499, 4294967240
  %v1547 = vlaneseq
  %v1548 = vshrl.u32 %v1547, 7
  %v1549 = vsub.s32 %v1546, %v1548
  %v1550 = vrot.slane %v1265, %v1549
  %vm1551 = vcmask 523712
  %v1552 = vsel %vm1551, %v1550, %v1545
  %v1553 = vlaneseq
  %v1554 = vshrl.u32 %v1553, 7
  %v1555 = vsub.s32 %v1499, %v1554
  %v1556 = vrot.slane %v1268, %v1555
  %v1557 = vlaneseq
  %v1558 = vshrl.u32 %v1557, 7
  %v1559 = vsub.s32 %v1504, %v1558
  %v1560 = vrot.slane %v1271, %v1559
  %v1561 = vsel %vm1509, %v1560, %v1556
  %v1562 = vlaneseq
  %v1563 = vshrl.u32 %v1562, 7
  %v1564 = vsub.s32 %v1511, %v1563
  %v1565 = vrot.slane %v1274, %v1564
  %v1566 = vsel %vm1516, %v1565, %v1561
  %v1567 = vlaneseq
  %v1568 = vshrl.u32 %v1567, 7
  %v1569 = vsub.s32 %v1518, %v1568
  %v1570 = vrot.slane %v1277, %v1569
  %v1571 = vsel %vm1523, %v1570, %v1566
  %v1572 = vlaneseq
  %v1573 = vshrl.u32 %v1572, 7
  %v1574 = vsub.s32 %v1525, %v1573
  %v1575 = vrot.slane %v1280, %v1574
  %v1576 = vsel %vm1530, %v1575, %v1571
  %v1577 = vlaneseq
  %v1578 = vshrl.u32 %v1577, 7
  %v1579 = vsub.s32 %v1532, %v1578
  %v1580 = vrot.slane %v1283, %v1579
  %v1581 = vsel %vm1537, %v1580, %v1576
  %v1582 = vlaneseq
  %v1583 = vshrl.u32 %v1582, 7
  %v1584 = vsub.s32 %v1539, %v1583
  %v1585 = vrot.slane %v1286, %v1584
  %v1586 = vsel %vm1544, %v1585, %v1581
  %v1587 = vlaneseq
  %v1588 = vshrl.u32 %v1587, 7
  %v1589 = vsub.s32 %v1546, %v1588
  %v1590 = vrot.slane %v1289, %v1589
  %v1591 = vsel %vm1551, %v1590, %v1586
  %v1592 = vlaneseq
  %v1593 = vshrl.u32 %v1592, 7
  %v1594 = vsub.s32 %v1499, %v1593
  %v1595 = vrot.slane %v1292, %v1594
  %v1596 = vlaneseq
  %v1597 = vshrl.u32 %v1596, 7
  %v1598 = vsub.s32 %v1504, %v1597
  %v1599 = vrot.slane %v1295, %v1598
  %v1600 = vsel %vm1509, %v1599, %v1595
  %v1601 = vlaneseq
  %v1602 = vshrl.u32 %v1601, 7
  %v1603 = vsub.s32 %v1511, %v1602
  %v1604 = vrot.slane %v1298, %v1603
  %v1605 = vsel %vm1516, %v1604, %v1600
  %v1606 = vlaneseq
  %v1607 = vshrl.u32 %v1606, 7
  %v1608 = vsub.s32 %v1518, %v1607
  %v1609 = vrot.slane %v1301, %v1608
  %v1610 = vsel %vm1523, %v1609, %v1605
  %v1611 = vlaneseq
  %v1612 = vshrl.u32 %v1611, 7
  %v1613 = vsub.s32 %v1525, %v1612
  %v1614 = vrot.slane %v1304, %v1613
  %v1615 = vsel %vm1530, %v1614, %v1610
  %v1616 = vlaneseq
  %v1617 = vshrl.u32 %v1616, 7
  %v1618 = vsub.s32 %v1532, %v1617
  %v1619 = vrot.slane %v1307, %v1618
  %v1620 = vsel %vm1537, %v1619, %v1615
  %v1621 = vlaneseq
  %v1622 = vshrl.u32 %v1621, 7
  %v1623 = vsub.s32 %v1539, %v1622
  %v1624 = vrot.slane %v1310, %v1623
  %v1625 = vsel %vm1544, %v1624, %v1620
  %v1626 = vlaneseq
  %v1627 = vshrl.u32 %v1626, 7
  %v1628 = vsub.s32 %v1546, %v1627
  %v1629 = vrot.slane %v1313, %v1628
  %v1630 = vsel %vm1551, %v1629, %v1625
  %v1631 = vlaneseq
  %v1632 = vshrl.u32 %v1631, 7
  %v1633 = vsub.s32 %v1499, %v1632
  %v1634 = vrot.slane %v1316, %v1633
  %v1635 = vlaneseq
  %v1636 = vshrl.u32 %v1635, 7
  %v1637 = vsub.s32 %v1504, %v1636
  %v1638 = vrot.slane %v1319, %v1637
  %v1639 = vsel %vm1509, %v1638, %v1634
  %v1640 = vlaneseq
  %v1641 = vshrl.u32 %v1640, 7
  %v1642 = vsub.s32 %v1511, %v1641
  %v1643 = vrot.slane %v1322, %v1642
  %v1644 = vsel %vm1516, %v1643, %v1639
  %v1645 = vlaneseq
  %v1646 = vshrl.u32 %v1645, 7
  %v1647 = vsub.s32 %v1518, %v1646
  %v1648 = vrot.slane %v1325, %v1647
  %v1649 = vsel %vm1523, %v1648, %v1644
  %v1650 = vlaneseq
  %v1651 = vshrl.u32 %v1650, 7
  %v1652 = vsub.s32 %v1525, %v1651
  %v1653 = vrot.slane %v1328, %v1652
  %v1654 = vsel %vm1530, %v1653, %v1649
  %v1655 = vlaneseq
  %v1656 = vshrl.u32 %v1655, 7
  %v1657 = vsub.s32 %v1532, %v1656
  %v1658 = vrot.slane %v1331, %v1657
  %v1659 = vsel %vm1537, %v1658, %v1654
  %v1660 = vlaneseq
  %v1661 = vshrl.u32 %v1660, 7
  %v1662 = vsub.s32 %v1539, %v1661
  %v1663 = vrot.slane %v1334, %v1662
  %v1664 = vsel %vm1544, %v1663, %v1659
  %v1665 = vlaneseq
  %v1666 = vshrl.u32 %v1665, 7
  %v1667 = vsub.s32 %v1546, %v1666
  %v1668 = vrot.slane %v1337, %v1667
  %v1669 = vsel %vm1551, %v1668, %v1664
  %v1670 = vlaneseq
  %v1671 = vshrl.u32 %v1670, 7
  %v1672 = vsub.s32 %v1499, %v1671
  %v1673 = vrot.slane %v1340, %v1672
  %v1674 = vlaneseq
  %v1675 = vshrl.u32 %v1674, 7
  %v1676 = vsub.s32 %v1504, %v1675
  %v1677 = vrot.slane %v1343, %v1676
  %v1678 = vsel %vm1509, %v1677, %v1673
  %v1679 = vlaneseq
  %v1680 = vshrl.u32 %v1679, 7
  %v1681 = vsub.s32 %v1511, %v1680
  %v1682 = vrot.slane %v1346, %v1681
  %v1683 = vsel %vm1516, %v1682, %v1678
  %v1684 = vlaneseq
  %v1685 = vshrl.u32 %v1684, 7
  %v1686 = vsub.s32 %v1518, %v1685
  %v1687 = vrot.slane %v1349, %v1686
  %v1688 = vsel %vm1523, %v1687, %v1683
  %v1689 = vlaneseq
  %v1690 = vshrl.u32 %v1689, 7
  %v1691 = vsub.s32 %v1525, %v1690
  %v1692 = vrot.slane %v1352, %v1691
  %v1693 = vsel %vm1530, %v1692, %v1688
  %v1694 = vlaneseq
  %v1695 = vshrl.u32 %v1694, 7
  %v1696 = vsub.s32 %v1532, %v1695
  %v1697 = vrot.slane %v1355, %v1696
  %v1698 = vsel %vm1537, %v1697, %v1693
  %v1699 = vlaneseq
  %v1700 = vshrl.u32 %v1699, 7
  %v1701 = vsub.s32 %v1539, %v1700
  %v1702 = vrot.slane %v1358, %v1701
  %v1703 = vsel %vm1544, %v1702, %v1698
  %v1704 = vlaneseq
  %v1705 = vshrl.u32 %v1704, 7
  %v1706 = vsub.s32 %v1546, %v1705
  %v1707 = vrot.slane %v1361, %v1706
  %v1708 = vsel %vm1551, %v1707, %v1703
  %v1709 = vlaneseq
  %v1710 = vshrl.u32 %v1709, 7
  %v1711 = vsub.s32 %v1499, %v1710
  %v1712 = vrot.slane %v1364, %v1711
  %v1713 = vlaneseq
  %v1714 = vshrl.u32 %v1713, 7
  %v1715 = vsub.s32 %v1504, %v1714
  %v1716 = vrot.slane %v1367, %v1715
  %v1717 = vsel %vm1509, %v1716, %v1712
  %v1718 = vlaneseq
  %v1719 = vshrl.u32 %v1718, 7
  %v1720 = vsub.s32 %v1511, %v1719
  %v1721 = vrot.slane %v1370, %v1720
  %v1722 = vsel %vm1516, %v1721, %v1717
  %v1723 = vlaneseq
  %v1724 = vshrl.u32 %v1723, 7
  %v1725 = vsub.s32 %v1518, %v1724
  %v1726 = vrot.slane %v1373, %v1725
  %v1727 = vsel %vm1523, %v1726, %v1722
  %v1728 = vlaneseq
  %v1729 = vshrl.u32 %v1728, 7
  %v1730 = vsub.s32 %v1525, %v1729
  %v1731 = vrot.slane %v1376, %v1730
  %v1732 = vsel %vm1530, %v1731, %v1727
  %v1733 = vlaneseq
  %v1734 = vshrl.u32 %v1733, 7
  %v1735 = vsub.s32 %v1532, %v1734
  %v1736 = vrot.slane %v1379, %v1735
  %v1737 = vsel %vm1537, %v1736, %v1732
  %v1738 = vlaneseq
  %v1739 = vshrl.u32 %v1738, 7
  %v1740 = vsub.s32 %v1539, %v1739
  %v1741 = vrot.slane %v1382, %v1740
  %v1742 = vsel %vm1544, %v1741, %v1737
  %v1743 = vlaneseq
  %v1744 = vshrl.u32 %v1743, 7
  %v1745 = vsub.s32 %v1546, %v1744
  %v1746 = vrot.slane %v1385, %v1745
  %v1747 = vsel %vm1551, %v1746, %v1742
  %v1748 = vlaneseq
  %v1749 = vshrl.u32 %v1748, 7
  %v1750 = vsub.s32 %v1499, %v1749
  %v1751 = vrot.slane %v1388, %v1750
  %v1752 = vlaneseq
  %v1753 = vshrl.u32 %v1752, 7
  %v1754 = vsub.s32 %v1504, %v1753
  %v1755 = vrot.slane %v1391, %v1754
  %v1756 = vsel %vm1509, %v1755, %v1751
  %v1757 = vlaneseq
  %v1758 = vshrl.u32 %v1757, 7
  %v1759 = vsub.s32 %v1511, %v1758
  %v1760 = vrot.slane %v1394, %v1759
  %v1761 = vsel %vm1516, %v1760, %v1756
  %v1762 = vlaneseq
  %v1763 = vshrl.u32 %v1762, 7
  %v1764 = vsub.s32 %v1518, %v1763
  %v1765 = vrot.slane %v1397, %v1764
  %v1766 = vsel %vm1523, %v1765, %v1761
  %v1767 = vlaneseq
  %v1768 = vshrl.u32 %v1767, 7
  %v1769 = vsub.s32 %v1525, %v1768
  %v1770 = vrot.slane %v1400, %v1769
  %v1771 = vsel %vm1530, %v1770, %v1766
  %v1772 = vlaneseq
  %v1773 = vshrl.u32 %v1772, 7
  %v1774 = vsub.s32 %v1532, %v1773
  %v1775 = vrot.slane %v1403, %v1774
  %v1776 = vsel %vm1537, %v1775, %v1771
  %v1777 = vlaneseq
  %v1778 = vshrl.u32 %v1777, 7
  %v1779 = vsub.s32 %v1539, %v1778
  %v1780 = vrot.slane %v1406, %v1779
  %v1781 = vsel %vm1544, %v1780, %v1776
  %v1782 = vlaneseq
  %v1783 = vshrl.u32 %v1782, 7
  %v1784 = vsub.s32 %v1546, %v1783
  %v1785 = vrot.slane %v1409, %v1784
  %v1786 = vsel %vm1551, %v1785, %v1781
  %v1787 = vlaneseq
  %v1788 = vshrl.u32 %v1787, 7
  %v1789 = vsub.s32 %v1499, %v1788
  %v1790 = vrot.slane %v1412, %v1789
  %v1791 = vlaneseq
  %v1792 = vshrl.u32 %v1791, 7
  %v1793 = vsub.s32 %v1504, %v1792
  %v1794 = vrot.slane %v1415, %v1793
  %v1795 = vsel %vm1509, %v1794, %v1790
  %v1796 = vlaneseq
  %v1797 = vshrl.u32 %v1796, 7
  %v1798 = vsub.s32 %v1511, %v1797
  %v1799 = vrot.slane %v1418, %v1798
  %v1800 = vsel %vm1516, %v1799, %v1795
  %v1801 = vlaneseq
  %v1802 = vshrl.u32 %v1801, 7
  %v1803 = vsub.s32 %v1518, %v1802
  %v1804 = vrot.slane %v1421, %v1803
  %v1805 = vsel %vm1523, %v1804, %v1800
  %v1806 = vlaneseq
  %v1807 = vshrl.u32 %v1806, 7
  %v1808 = vsub.s32 %v1525, %v1807
  %v1809 = vrot.slane %v1424, %v1808
  %v1810 = vsel %vm1530, %v1809, %v1805
  %v1811 = vlaneseq
  %v1812 = vshrl.u32 %v1811, 7
  %v1813 = vsub.s32 %v1532, %v1812
  %v1814 = vrot.slane %v1427, %v1813
  %v1815 = vsel %vm1537, %v1814, %v1810
  %v1816 = vlaneseq
  %v1817 = vshrl.u32 %v1816, 7
  %v1818 = vsub.s32 %v1539, %v1817
  %v1819 = vrot.slane %v1430, %v1818
  %v1820 = vsel %vm1544, %v1819, %v1815
  %v1821 = vlaneseq
  %v1822 = vshrl.u32 %v1821, 7
  %v1823 = vsub.s32 %v1546, %v1822
  %v1824 = vrot.slane %v1433, %v1823
  %v1825 = vsel %vm1551, %v1824, %v1820
  %vm1826 = vcmask 1041409
  %v1827 = vsel %vm1826, %v1591, %v1552
  %vm1828 = vcmask 1042434
  %v1829 = vsel %vm1828, %v1630, %v1827
  %vm1830 = vcmask 1043459
  %v1831 = vsel %vm1830, %v1669, %v1829
  %vm1832 = vcmask 1044484
  %v1833 = vsel %vm1832, %v1708, %v1831
  %vm1834 = vcmask 1045509
  %v1835 = vsel %vm1834, %v1747, %v1833
  %vm1836 = vcmask 1046534
  %v1837 = vsel %vm1836, %v1786, %v1835
  %vm1838 = vcmask 1047559
  %v1839 = vsel %vm1838, %v1825, %v1837
  %v1841 = vsel %vm488, %v1839, 0.0
  %1842 = vadd.xlane.f32.xlu0 %v1841
  %v1843 = vpop.xlane.xlu0 %1842
  %v1844 = vadd.f32 %v1843, %v1176
  %vm1845 = vcmask 7168
  %1846 = vst.msk [vmem:[%s9] sm:$0xff] %vm1845, %v1844
  %v1847 = vmul.f32 %v1112, %v1074
  %v1848 = vmul.f32 %v1113, %v1079
  %v1849 = vmul.f32 %v1114, %v1084
  %v1850 = vmul.f32 %v1115, %v1089
  %v1851 = vmul.f32 %v1116, %v1094
  %v1852 = vmul.f32 %v1117, %v1099
  %v1853 = vmul.f32 %v1118, %v1104
  %v1854 = vmul.f32 %v1119, %v1109
  %v1855 = vmul.f32 %v1120, %v1074
  %v1856 = vmul.f32 %v1121, %v1079
  %v1857 = vmul.f32 %v1122, %v1084
  %v1858 = vmul.f32 %v1123, %v1089
  %v1859 = vmul.f32 %v1124, %v1094
  %v1860 = vmul.f32 %v1125, %v1099
  %v1861 = vmul.f32 %v1126, %v1104
  %v1862 = vmul.f32 %v1127, %v1109
  %v1863 = vmul.f32 %v1128, %v1074
  %v1864 = vmul.f32 %v1129, %v1079
  %v1865 = vmul.f32 %v1130, %v1084
  %v1866 = vmul.f32 %v1131, %v1089
  %v1867 = vmul.f32 %v1132, %v1094
  %v1868 = vmul.f32 %v1133, %v1099
  %v1869 = vmul.f32 %v1134, %v1104
  %v1870 = vmul.f32 %v1135, %v1109
  %v1871 = vmul.f32 %v1136, %v1074
  %v1872 = vmul.f32 %v1137, %v1079
  %v1873 = vmul.f32 %v1138, %v1084
  %v1874 = vmul.f32 %v1139, %v1089
  %v1875 = vmul.f32 %v1140, %v1094
  %v1876 = vmul.f32 %v1141, %v1099
  %v1877 = vmul.f32 %v1142, %v1104
  %v1878 = vmul.f32 %v1143, %v1109
  %v1879 = vmul.f32 %v1144, %v1074
  %v1880 = vmul.f32 %v1145, %v1079
  %v1881 = vmul.f32 %v1146, %v1084
  %v1882 = vmul.f32 %v1147, %v1089
  %v1883 = vmul.f32 %v1148, %v1094
  %v1884 = vmul.f32 %v1149, %v1099
  %v1885 = vmul.f32 %v1150, %v1104
  %v1886 = vmul.f32 %v1151, %v1109
  %v1887 = vmul.f32 %v1152, %v1074
  %v1888 = vmul.f32 %v1153, %v1079
  %v1889 = vmul.f32 %v1154, %v1084
  %v1890 = vmul.f32 %v1155, %v1089
  %v1891 = vmul.f32 %v1156, %v1094
  %v1892 = vmul.f32 %v1157, %v1099
  %v1893 = vmul.f32 %v1158, %v1104
  %v1894 = vmul.f32 %v1159, %v1109
  %v1895 = vmul.f32 %v1160, %v1074
  %v1896 = vmul.f32 %v1161, %v1079
  %v1897 = vmul.f32 %v1162, %v1084
  %v1898 = vmul.f32 %v1163, %v1089
  %v1899 = vmul.f32 %v1164, %v1094
  %v1900 = vmul.f32 %v1165, %v1099
  %v1901 = vmul.f32 %v1166, %v1104
  %v1902 = vmul.f32 %v1167, %v1109
  %v1903 = vmul.f32 %v1168, %v1074
  %v1904 = vmul.f32 %v1169, %v1079
  %v1905 = vmul.f32 %v1170, %v1084
  %v1906 = vmul.f32 %v1171, %v1089
  %v1907 = vmul.f32 %v1172, %v1094
  %v1908 = vmul.f32 %v1173, %v1099
  %v1909 = vmul.f32 %v1174, %v1104
  %v1910 = vmul.f32 %v1175, %v1109
  %v1911 = vsel %vm1241, %v1847, 0.0
  %1912 = vadd.xlane.f32.xlu0 %v1911
  %v1913 = vpop.xlane.xlu0 %1912
  %v1914 = vsel %vm1241, %v1848, 0.0
  %1915 = vadd.xlane.f32.xlu0 %v1914
  %v1916 = vpop.xlane.xlu0 %1915
  %v1917 = vsel %vm1241, %v1849, 0.0
  %1918 = vadd.xlane.f32.xlu0 %v1917
  %v1919 = vpop.xlane.xlu0 %1918
  %v1920 = vsel %vm1241, %v1850, 0.0
  %1921 = vadd.xlane.f32.xlu0 %v1920
  %v1922 = vpop.xlane.xlu0 %1921
  %v1923 = vsel %vm1241, %v1851, 0.0
  %1924 = vadd.xlane.f32.xlu0 %v1923
  %v1925 = vpop.xlane.xlu0 %1924
  %v1926 = vsel %vm1241, %v1852, 0.0
  %1927 = vadd.xlane.f32.xlu0 %v1926
  %v1928 = vpop.xlane.xlu0 %1927
  %v1929 = vsel %vm1241, %v1853, 0.0
  %1930 = vadd.xlane.f32.xlu0 %v1929
  %v1931 = vpop.xlane.xlu0 %1930
  %v1932 = vsel %vm1241, %v1854, 0.0
  %1933 = vadd.xlane.f32.xlu0 %v1932
  %v1934 = vpop.xlane.xlu0 %1933
  %v1935 = vsel %vm1241, %v1855, 0.0
  %1936 = vadd.xlane.f32.xlu0 %v1935
  %v1937 = vpop.xlane.xlu0 %1936
  %v1938 = vsel %vm1241, %v1856, 0.0
  %1939 = vadd.xlane.f32.xlu0 %v1938
  %v1940 = vpop.xlane.xlu0 %1939
  %v1941 = vsel %vm1241, %v1857, 0.0
  %1942 = vadd.xlane.f32.xlu0 %v1941
  %v1943 = vpop.xlane.xlu0 %1942
  %v1944 = vsel %vm1241, %v1858, 0.0
  %1945 = vadd.xlane.f32.xlu0 %v1944
  %v1946 = vpop.xlane.xlu0 %1945
  %v1947 = vsel %vm1241, %v1859, 0.0
  %1948 = vadd.xlane.f32.xlu0 %v1947
  %v1949 = vpop.xlane.xlu0 %1948
  %v1950 = vsel %vm1241, %v1860, 0.0
  %1951 = vadd.xlane.f32.xlu0 %v1950
  %v1952 = vpop.xlane.xlu0 %1951
  %v1953 = vsel %vm1241, %v1861, 0.0
  %1954 = vadd.xlane.f32.xlu0 %v1953
  %v1955 = vpop.xlane.xlu0 %1954
  %v1956 = vsel %vm1241, %v1862, 0.0
  %1957 = vadd.xlane.f32.xlu0 %v1956
  %v1958 = vpop.xlane.xlu0 %1957
  %v1959 = vsel %vm1241, %v1863, 0.0
  %1960 = vadd.xlane.f32.xlu0 %v1959
  %v1961 = vpop.xlane.xlu0 %1960
  %v1962 = vsel %vm1241, %v1864, 0.0
  %1963 = vadd.xlane.f32.xlu0 %v1962
  %v1964 = vpop.xlane.xlu0 %1963
  %v1965 = vsel %vm1241, %v1865, 0.0
  %1966 = vadd.xlane.f32.xlu0 %v1965
  %v1967 = vpop.xlane.xlu0 %1966
  %v1968 = vsel %vm1241, %v1866, 0.0
  %1969 = vadd.xlane.f32.xlu0 %v1968
  %v1970 = vpop.xlane.xlu0 %1969
  %v1971 = vsel %vm1241, %v1867, 0.0
  %1972 = vadd.xlane.f32.xlu0 %v1971
  %v1973 = vpop.xlane.xlu0 %1972
  %v1974 = vsel %vm1241, %v1868, 0.0
  %1975 = vadd.xlane.f32.xlu0 %v1974
  %v1976 = vpop.xlane.xlu0 %1975
  %v1977 = vsel %vm1241, %v1869, 0.0
  %1978 = vadd.xlane.f32.xlu0 %v1977
  %v1979 = vpop.xlane.xlu0 %1978
  %v1980 = vsel %vm1241, %v1870, 0.0
  %1981 = vadd.xlane.f32.xlu0 %v1980
  %v1982 = vpop.xlane.xlu0 %1981
  %v1983 = vsel %vm1241, %v1871, 0.0
  %1984 = vadd.xlane.f32.xlu0 %v1983
  %v1985 = vpop.xlane.xlu0 %1984
  %v1986 = vsel %vm1241, %v1872, 0.0
  %1987 = vadd.xlane.f32.xlu0 %v1986
  %v1988 = vpop.xlane.xlu0 %1987
  %v1989 = vsel %vm1241, %v1873, 0.0
  %1990 = vadd.xlane.f32.xlu0 %v1989
  %v1991 = vpop.xlane.xlu0 %1990
  %v1992 = vsel %vm1241, %v1874, 0.0
  %1993 = vadd.xlane.f32.xlu0 %v1992
  %v1994 = vpop.xlane.xlu0 %1993
  %v1995 = vsel %vm1241, %v1875, 0.0
  %1996 = vadd.xlane.f32.xlu0 %v1995
  %v1997 = vpop.xlane.xlu0 %1996
  %v1998 = vsel %vm1241, %v1876, 0.0
  %1999 = vadd.xlane.f32.xlu0 %v1998
  %v2000 = vpop.xlane.xlu0 %1999
  %v2001 = vsel %vm1241, %v1877, 0.0
  %2002 = vadd.xlane.f32.xlu0 %v2001
  %v2003 = vpop.xlane.xlu0 %2002
  %v2004 = vsel %vm1241, %v1878, 0.0
  %2005 = vadd.xlane.f32.xlu0 %v2004
  %v2006 = vpop.xlane.xlu0 %2005
  %v2007 = vsel %vm1241, %v1879, 0.0
  %2008 = vadd.xlane.f32.xlu0 %v2007
  %v2009 = vpop.xlane.xlu0 %2008
  %v2010 = vsel %vm1241, %v1880, 0.0
  %2011 = vadd.xlane.f32.xlu0 %v2010
  %v2012 = vpop.xlane.xlu0 %2011
  %v2013 = vsel %vm1241, %v1881, 0.0
  %2014 = vadd.xlane.f32.xlu0 %v2013
  %v2015 = vpop.xlane.xlu0 %2014
  %v2016 = vsel %vm1241, %v1882, 0.0
  %2017 = vadd.xlane.f32.xlu0 %v2016
  %v2018 = vpop.xlane.xlu0 %2017
  %v2019 = vsel %vm1241, %v1883, 0.0
  %2020 = vadd.xlane.f32.xlu0 %v2019
  %v2021 = vpop.xlane.xlu0 %2020
  %v2022 = vsel %vm1241, %v1884, 0.0
  %2023 = vadd.xlane.f32.xlu0 %v2022
  %v2024 = vpop.xlane.xlu0 %2023
  %v2025 = vsel %vm1241, %v1885, 0.0
  %2026 = vadd.xlane.f32.xlu0 %v2025
  %v2027 = vpop.xlane.xlu0 %2026
  %v2028 = vsel %vm1241, %v1886, 0.0
  %2029 = vadd.xlane.f32.xlu0 %v2028
  %v2030 = vpop.xlane.xlu0 %2029
  %v2031 = vsel %vm1241, %v1887, 0.0
  %2032 = vadd.xlane.f32.xlu0 %v2031
  %v2033 = vpop.xlane.xlu0 %2032
  %v2034 = vsel %vm1241, %v1888, 0.0
  %2035 = vadd.xlane.f32.xlu0 %v2034
  %v2036 = vpop.xlane.xlu0 %2035
  %v2037 = vsel %vm1241, %v1889, 0.0
  %2038 = vadd.xlane.f32.xlu0 %v2037
  %v2039 = vpop.xlane.xlu0 %2038
  %v2040 = vsel %vm1241, %v1890, 0.0
  %2041 = vadd.xlane.f32.xlu0 %v2040
  %v2042 = vpop.xlane.xlu0 %2041
  %v2043 = vsel %vm1241, %v1891, 0.0
  %2044 = vadd.xlane.f32.xlu0 %v2043
  %v2045 = vpop.xlane.xlu0 %2044
  %v2046 = vsel %vm1241, %v1892, 0.0
  %2047 = vadd.xlane.f32.xlu0 %v2046
  %v2048 = vpop.xlane.xlu0 %2047
  %v2049 = vsel %vm1241, %v1893, 0.0
  %2050 = vadd.xlane.f32.xlu0 %v2049
  %v2051 = vpop.xlane.xlu0 %2050
  %v2052 = vsel %vm1241, %v1894, 0.0
  %2053 = vadd.xlane.f32.xlu0 %v2052
  %v2054 = vpop.xlane.xlu0 %2053
  %v2055 = vsel %vm1241, %v1895, 0.0
  %2056 = vadd.xlane.f32.xlu0 %v2055
  %v2057 = vpop.xlane.xlu0 %2056
  %v2058 = vsel %vm1241, %v1896, 0.0
  %2059 = vadd.xlane.f32.xlu0 %v2058
  %v2060 = vpop.xlane.xlu0 %2059
  %v2061 = vsel %vm1241, %v1897, 0.0
  %2062 = vadd.xlane.f32.xlu0 %v2061
  %v2063 = vpop.xlane.xlu0 %2062
  %v2064 = vsel %vm1241, %v1898, 0.0
  %2065 = vadd.xlane.f32.xlu0 %v2064
  %v2066 = vpop.xlane.xlu0 %2065
  %v2067 = vsel %vm1241, %v1899, 0.0
  %2068 = vadd.xlane.f32.xlu0 %v2067
  %v2069 = vpop.xlane.xlu0 %2068
  %v2070 = vsel %vm1241, %v1900, 0.0
  %2071 = vadd.xlane.f32.xlu0 %v2070
  %v2072 = vpop.xlane.xlu0 %2071
  %v2073 = vsel %vm1241, %v1901, 0.0
  %2074 = vadd.xlane.f32.xlu0 %v2073
  %v2075 = vpop.xlane.xlu0 %2074
  %v2076 = vsel %vm1241, %v1902, 0.0
  %2077 = vadd.xlane.f32.xlu0 %v2076
  %v2078 = vpop.xlane.xlu0 %2077
  %v2079 = vsel %vm1241, %v1903, 0.0
  %2080 = vadd.xlane.f32.xlu0 %v2079
  %v2081 = vpop.xlane.xlu0 %2080
  %v2082 = vsel %vm1241, %v1904, 0.0
  %2083 = vadd.xlane.f32.xlu0 %v2082
  %v2084 = vpop.xlane.xlu0 %2083
  %v2085 = vsel %vm1241, %v1905, 0.0
  %2086 = vadd.xlane.f32.xlu0 %v2085
  %v2087 = vpop.xlane.xlu0 %2086
  %v2088 = vsel %vm1241, %v1906, 0.0
  %2089 = vadd.xlane.f32.xlu0 %v2088
  %v2090 = vpop.xlane.xlu0 %2089
  %v2091 = vsel %vm1241, %v1907, 0.0
  %2092 = vadd.xlane.f32.xlu0 %v2091
  %v2093 = vpop.xlane.xlu0 %2092
  %v2094 = vsel %vm1241, %v1908, 0.0
  %2095 = vadd.xlane.f32.xlu0 %v2094
  %v2096 = vpop.xlane.xlu0 %2095
  %v2097 = vsel %vm1241, %v1909, 0.0
  %2098 = vadd.xlane.f32.xlu0 %v2097
  %v2099 = vpop.xlane.xlu0 %2098
  %v2100 = vsel %vm1241, %v1910, 0.0
  %2101 = vadd.xlane.f32.xlu0 %v2100
  %v2102 = vpop.xlane.xlu0 %2101
  %v2167 = vlaneseq
  %v2168 = vshrl.u32 %v2167, 7
  %v2169 = vsub.s32 %v1499, %v2168
  %v2170 = vrot.slane %v1913, %v2169
  %v2171 = vlaneseq
  %v2172 = vshrl.u32 %v2171, 7
  %v2173 = vsub.s32 %v1504, %v2172
  %v2174 = vrot.slane %v1916, %v2173
  %v2175 = vsel %vm1509, %v2174, %v2170
  %v2176 = vlaneseq
  %v2177 = vshrl.u32 %v2176, 7
  %v2178 = vsub.s32 %v1511, %v2177
  %v2179 = vrot.slane %v1919, %v2178
  %v2180 = vsel %vm1516, %v2179, %v2175
  %v2181 = vlaneseq
  %v2182 = vshrl.u32 %v2181, 7
  %v2183 = vsub.s32 %v1518, %v2182
  %v2184 = vrot.slane %v1922, %v2183
  %v2185 = vsel %vm1523, %v2184, %v2180
  %v2186 = vlaneseq
  %v2187 = vshrl.u32 %v2186, 7
  %v2188 = vsub.s32 %v1525, %v2187
  %v2189 = vrot.slane %v1925, %v2188
  %v2190 = vsel %vm1530, %v2189, %v2185
  %v2191 = vlaneseq
  %v2192 = vshrl.u32 %v2191, 7
  %v2193 = vsub.s32 %v1532, %v2192
  %v2194 = vrot.slane %v1928, %v2193
  %v2195 = vsel %vm1537, %v2194, %v2190
  %v2196 = vlaneseq
  %v2197 = vshrl.u32 %v2196, 7
  %v2198 = vsub.s32 %v1539, %v2197
  %v2199 = vrot.slane %v1931, %v2198
  %v2200 = vsel %vm1544, %v2199, %v2195
  %v2201 = vlaneseq
  %v2202 = vshrl.u32 %v2201, 7
  %v2203 = vsub.s32 %v1546, %v2202
  %v2204 = vrot.slane %v1934, %v2203
  %v2205 = vsel %vm1551, %v2204, %v2200
  %v2206 = vlaneseq
  %v2207 = vshrl.u32 %v2206, 7
  %v2208 = vsub.s32 %v1499, %v2207
  %v2209 = vrot.slane %v1937, %v2208
  %v2210 = vlaneseq
  %v2211 = vshrl.u32 %v2210, 7
  %v2212 = vsub.s32 %v1504, %v2211
  %v2213 = vrot.slane %v1940, %v2212
  %v2214 = vsel %vm1509, %v2213, %v2209
  %v2215 = vlaneseq
  %v2216 = vshrl.u32 %v2215, 7
  %v2217 = vsub.s32 %v1511, %v2216
  %v2218 = vrot.slane %v1943, %v2217
  %v2219 = vsel %vm1516, %v2218, %v2214
  %v2220 = vlaneseq
  %v2221 = vshrl.u32 %v2220, 7
  %v2222 = vsub.s32 %v1518, %v2221
  %v2223 = vrot.slane %v1946, %v2222
  %v2224 = vsel %vm1523, %v2223, %v2219
  %v2225 = vlaneseq
  %v2226 = vshrl.u32 %v2225, 7
  %v2227 = vsub.s32 %v1525, %v2226
  %v2228 = vrot.slane %v1949, %v2227
  %v2229 = vsel %vm1530, %v2228, %v2224
  %v2230 = vlaneseq
  %v2231 = vshrl.u32 %v2230, 7
  %v2232 = vsub.s32 %v1532, %v2231
  %v2233 = vrot.slane %v1952, %v2232
  %v2234 = vsel %vm1537, %v2233, %v2229
  %v2235 = vlaneseq
  %v2236 = vshrl.u32 %v2235, 7
  %v2237 = vsub.s32 %v1539, %v2236
  %v2238 = vrot.slane %v1955, %v2237
  %v2239 = vsel %vm1544, %v2238, %v2234
  %v2240 = vlaneseq
  %v2241 = vshrl.u32 %v2240, 7
  %v2242 = vsub.s32 %v1546, %v2241
  %v2243 = vrot.slane %v1958, %v2242
  %v2244 = vsel %vm1551, %v2243, %v2239
  %v2245 = vlaneseq
  %v2246 = vshrl.u32 %v2245, 7
  %v2247 = vsub.s32 %v1499, %v2246
  %v2248 = vrot.slane %v1961, %v2247
  %v2249 = vlaneseq
  %v2250 = vshrl.u32 %v2249, 7
  %v2251 = vsub.s32 %v1504, %v2250
  %v2252 = vrot.slane %v1964, %v2251
  %v2253 = vsel %vm1509, %v2252, %v2248
  %v2254 = vlaneseq
  %v2255 = vshrl.u32 %v2254, 7
  %v2256 = vsub.s32 %v1511, %v2255
  %v2257 = vrot.slane %v1967, %v2256
  %v2258 = vsel %vm1516, %v2257, %v2253
  %v2259 = vlaneseq
  %v2260 = vshrl.u32 %v2259, 7
  %v2261 = vsub.s32 %v1518, %v2260
  %v2262 = vrot.slane %v1970, %v2261
  %v2263 = vsel %vm1523, %v2262, %v2258
  %v2264 = vlaneseq
  %v2265 = vshrl.u32 %v2264, 7
  %v2266 = vsub.s32 %v1525, %v2265
  %v2267 = vrot.slane %v1973, %v2266
  %v2268 = vsel %vm1530, %v2267, %v2263
  %v2269 = vlaneseq
  %v2270 = vshrl.u32 %v2269, 7
  %v2271 = vsub.s32 %v1532, %v2270
  %v2272 = vrot.slane %v1976, %v2271
  %v2273 = vsel %vm1537, %v2272, %v2268
  %v2274 = vlaneseq
  %v2275 = vshrl.u32 %v2274, 7
  %v2276 = vsub.s32 %v1539, %v2275
  %v2277 = vrot.slane %v1979, %v2276
  %v2278 = vsel %vm1544, %v2277, %v2273
  %v2279 = vlaneseq
  %v2280 = vshrl.u32 %v2279, 7
  %v2281 = vsub.s32 %v1546, %v2280
  %v2282 = vrot.slane %v1982, %v2281
  %v2283 = vsel %vm1551, %v2282, %v2278
  %v2284 = vlaneseq
  %v2285 = vshrl.u32 %v2284, 7
  %v2286 = vsub.s32 %v1499, %v2285
  %v2287 = vrot.slane %v1985, %v2286
  %v2288 = vlaneseq
  %v2289 = vshrl.u32 %v2288, 7
  %v2290 = vsub.s32 %v1504, %v2289
  %v2291 = vrot.slane %v1988, %v2290
  %v2292 = vsel %vm1509, %v2291, %v2287
  %v2293 = vlaneseq
  %v2294 = vshrl.u32 %v2293, 7
  %v2295 = vsub.s32 %v1511, %v2294
  %v2296 = vrot.slane %v1991, %v2295
  %v2297 = vsel %vm1516, %v2296, %v2292
  %v2298 = vlaneseq
  %v2299 = vshrl.u32 %v2298, 7
  %v2300 = vsub.s32 %v1518, %v2299
  %v2301 = vrot.slane %v1994, %v2300
  %v2302 = vsel %vm1523, %v2301, %v2297
  %v2303 = vlaneseq
  %v2304 = vshrl.u32 %v2303, 7
  %v2305 = vsub.s32 %v1525, %v2304
  %v2306 = vrot.slane %v1997, %v2305
  %v2307 = vsel %vm1530, %v2306, %v2302
  %v2308 = vlaneseq
  %v2309 = vshrl.u32 %v2308, 7
  %v2310 = vsub.s32 %v1532, %v2309
  %v2311 = vrot.slane %v2000, %v2310
  %v2312 = vsel %vm1537, %v2311, %v2307
  %v2313 = vlaneseq
  %v2314 = vshrl.u32 %v2313, 7
  %v2315 = vsub.s32 %v1539, %v2314
  %v2316 = vrot.slane %v2003, %v2315
  %v2317 = vsel %vm1544, %v2316, %v2312
  %v2318 = vlaneseq
  %v2319 = vshrl.u32 %v2318, 7
  %v2320 = vsub.s32 %v1546, %v2319
  %v2321 = vrot.slane %v2006, %v2320
  %v2322 = vsel %vm1551, %v2321, %v2317
  %v2323 = vlaneseq
  %v2324 = vshrl.u32 %v2323, 7
  %v2325 = vsub.s32 %v1499, %v2324
  %v2326 = vrot.slane %v2009, %v2325
  %v2327 = vlaneseq
  %v2328 = vshrl.u32 %v2327, 7
  %v2329 = vsub.s32 %v1504, %v2328
  %v2330 = vrot.slane %v2012, %v2329
  %v2331 = vsel %vm1509, %v2330, %v2326
  %v2332 = vlaneseq
  %v2333 = vshrl.u32 %v2332, 7
  %v2334 = vsub.s32 %v1511, %v2333
  %v2335 = vrot.slane %v2015, %v2334
  %v2336 = vsel %vm1516, %v2335, %v2331
  %v2337 = vlaneseq
  %v2338 = vshrl.u32 %v2337, 7
  %v2339 = vsub.s32 %v1518, %v2338
  %v2340 = vrot.slane %v2018, %v2339
  %v2341 = vsel %vm1523, %v2340, %v2336
  %v2342 = vlaneseq
  %v2343 = vshrl.u32 %v2342, 7
  %v2344 = vsub.s32 %v1525, %v2343
  %v2345 = vrot.slane %v2021, %v2344
  %v2346 = vsel %vm1530, %v2345, %v2341
  %v2347 = vlaneseq
  %v2348 = vshrl.u32 %v2347, 7
  %v2349 = vsub.s32 %v1532, %v2348
  %v2350 = vrot.slane %v2024, %v2349
  %v2351 = vsel %vm1537, %v2350, %v2346
  %v2352 = vlaneseq
  %v2353 = vshrl.u32 %v2352, 7
  %v2354 = vsub.s32 %v1539, %v2353
  %v2355 = vrot.slane %v2027, %v2354
  %v2356 = vsel %vm1544, %v2355, %v2351
  %v2357 = vlaneseq
  %v2358 = vshrl.u32 %v2357, 7
  %v2359 = vsub.s32 %v1546, %v2358
  %v2360 = vrot.slane %v2030, %v2359
  %v2361 = vsel %vm1551, %v2360, %v2356
  %v2362 = vlaneseq
  %v2363 = vshrl.u32 %v2362, 7
  %v2364 = vsub.s32 %v1499, %v2363
  %v2365 = vrot.slane %v2033, %v2364
  %v2366 = vlaneseq
  %v2367 = vshrl.u32 %v2366, 7
  %v2368 = vsub.s32 %v1504, %v2367
  %v2369 = vrot.slane %v2036, %v2368
  %v2370 = vsel %vm1509, %v2369, %v2365
  %v2371 = vlaneseq
  %v2372 = vshrl.u32 %v2371, 7
  %v2373 = vsub.s32 %v1511, %v2372
  %v2374 = vrot.slane %v2039, %v2373
  %v2375 = vsel %vm1516, %v2374, %v2370
  %v2376 = vlaneseq
  %v2377 = vshrl.u32 %v2376, 7
  %v2378 = vsub.s32 %v1518, %v2377
  %v2379 = vrot.slane %v2042, %v2378
  %v2380 = vsel %vm1523, %v2379, %v2375
  %v2381 = vlaneseq
  %v2382 = vshrl.u32 %v2381, 7
  %v2383 = vsub.s32 %v1525, %v2382
  %v2384 = vrot.slane %v2045, %v2383
  %v2385 = vsel %vm1530, %v2384, %v2380
  %v2386 = vlaneseq
  %v2387 = vshrl.u32 %v2386, 7
  %v2388 = vsub.s32 %v1532, %v2387
  %v2389 = vrot.slane %v2048, %v2388
  %v2390 = vsel %vm1537, %v2389, %v2385
  %v2391 = vlaneseq
  %v2392 = vshrl.u32 %v2391, 7
  %v2393 = vsub.s32 %v1539, %v2392
  %v2394 = vrot.slane %v2051, %v2393
  %v2395 = vsel %vm1544, %v2394, %v2390
  %v2396 = vlaneseq
  %v2397 = vshrl.u32 %v2396, 7
  %v2398 = vsub.s32 %v1546, %v2397
  %v2399 = vrot.slane %v2054, %v2398
  %v2400 = vsel %vm1551, %v2399, %v2395
  %v2401 = vlaneseq
  %v2402 = vshrl.u32 %v2401, 7
  %v2403 = vsub.s32 %v1499, %v2402
  %v2404 = vrot.slane %v2057, %v2403
  %v2405 = vlaneseq
  %v2406 = vshrl.u32 %v2405, 7
  %v2407 = vsub.s32 %v1504, %v2406
  %v2408 = vrot.slane %v2060, %v2407
  %v2409 = vsel %vm1509, %v2408, %v2404
  %v2410 = vlaneseq
  %v2411 = vshrl.u32 %v2410, 7
  %v2412 = vsub.s32 %v1511, %v2411
  %v2413 = vrot.slane %v2063, %v2412
  %v2414 = vsel %vm1516, %v2413, %v2409
  %v2415 = vlaneseq
  %v2416 = vshrl.u32 %v2415, 7
  %v2417 = vsub.s32 %v1518, %v2416
  %v2418 = vrot.slane %v2066, %v2417
  %v2419 = vsel %vm1523, %v2418, %v2414
  %v2420 = vlaneseq
  %v2421 = vshrl.u32 %v2420, 7
  %v2422 = vsub.s32 %v1525, %v2421
  %v2423 = vrot.slane %v2069, %v2422
  %v2424 = vsel %vm1530, %v2423, %v2419
  %v2425 = vlaneseq
  %v2426 = vshrl.u32 %v2425, 7
  %v2427 = vsub.s32 %v1532, %v2426
  %v2428 = vrot.slane %v2072, %v2427
  %v2429 = vsel %vm1537, %v2428, %v2424
  %v2430 = vlaneseq
  %v2431 = vshrl.u32 %v2430, 7
  %v2432 = vsub.s32 %v1539, %v2431
  %v2433 = vrot.slane %v2075, %v2432
  %v2434 = vsel %vm1544, %v2433, %v2429
  %v2435 = vlaneseq
  %v2436 = vshrl.u32 %v2435, 7
  %v2437 = vsub.s32 %v1546, %v2436
  %v2438 = vrot.slane %v2078, %v2437
  %v2439 = vsel %vm1551, %v2438, %v2434
  %v2440 = vlaneseq
  %v2441 = vshrl.u32 %v2440, 7
  %v2442 = vsub.s32 %v1499, %v2441
  %v2443 = vrot.slane %v2081, %v2442
  %v2444 = vlaneseq
  %v2445 = vshrl.u32 %v2444, 7
  %v2446 = vsub.s32 %v1504, %v2445
  %v2447 = vrot.slane %v2084, %v2446
  %v2448 = vsel %vm1509, %v2447, %v2443
  %v2449 = vlaneseq
  %v2450 = vshrl.u32 %v2449, 7
  %v2451 = vsub.s32 %v1511, %v2450
  %v2452 = vrot.slane %v2087, %v2451
  %v2453 = vsel %vm1516, %v2452, %v2448
  %v2454 = vlaneseq
  %v2455 = vshrl.u32 %v2454, 7
  %v2456 = vsub.s32 %v1518, %v2455
  %v2457 = vrot.slane %v2090, %v2456
  %v2458 = vsel %vm1523, %v2457, %v2453
  %v2459 = vlaneseq
  %v2460 = vshrl.u32 %v2459, 7
  %v2461 = vsub.s32 %v1525, %v2460
  %v2462 = vrot.slane %v2093, %v2461
  %v2463 = vsel %vm1530, %v2462, %v2458
  %v2464 = vlaneseq
  %v2465 = vshrl.u32 %v2464, 7
  %v2466 = vsub.s32 %v1532, %v2465
  %v2467 = vrot.slane %v2096, %v2466
  %v2468 = vsel %vm1537, %v2467, %v2463
  %v2469 = vlaneseq
  %v2470 = vshrl.u32 %v2469, 7
  %v2471 = vsub.s32 %v1539, %v2470
  %v2472 = vrot.slane %v2099, %v2471
  %v2473 = vsel %vm1544, %v2472, %v2468
  %v2474 = vlaneseq
  %v2475 = vshrl.u32 %v2474, 7
  %v2476 = vsub.s32 %v1546, %v2475
  %v2477 = vrot.slane %v2102, %v2476
  %v2478 = vsel %vm1551, %v2477, %v2473
  %v2479 = vsel %vm1826, %v2244, %v2205
  %v2480 = vsel %vm1828, %v2283, %v2479
  %v2481 = vsel %vm1830, %v2322, %v2480
  %v2482 = vsel %vm1832, %v2361, %v2481
  %v2483 = vsel %vm1834, %v2400, %v2482
  %v2484 = vsel %vm1836, %v2439, %v2483
  %v2485 = vsel %vm1838, %v2478, %v2484
  %v2487 = vsel %vm488, %v2485, 0.0
  %2488 = vadd.xlane.f32.xlu0 %v2487
  %v2489 = vpop.xlane.xlu0 %2488
  %v2490 = vadd.f32 %v2489, %v1176
  %2492 = vrot.lane.b32.xlu0 %v2490, 1
  %v2493 = vpop.permute.xlu0 %2492
  %vm2495 = vcmask 15368
  %2496 = vst.msk [vmem:[%s9] sm:$0xff] %vm2495, %v2493
  // Predicated region
  $region38: #{tpu_custom_call.1} parent=0 // pred_check
    _
  $region39: #{tpu_custom_call.1} parent=0 // pred_check_branch
    %2498 = sbr.rel (0) target = $region41
  $region40: #{tpu_custom_call.1} parent=0 // pred_region
    _
  $region41: #{tpu_custom_call.1} parent=0 // pred_fallthru
    _
  // Predicated region
  $region42: #{tpu_custom_call.1} parent=0 // pred_check
    _
  $region43: #{tpu_custom_call.1} parent=0 // pred_check_branch
    %2500 = sbr.rel (0) target = $region45
  $region44: #{tpu_custom_call.1} parent=0 // pred_region
    _
  $region45: #{tpu_custom_call.1} parent=0 // pred_fallthru
    _

</llo_original>
